<compile_context>
chip_gen: v7x
topology: tpu7x:2x2x1
jax: 0.10.0
libtpu: 0.0.40
codegen_flags: <defaults>
</compile_context>

<pallas_src>
import functools

import jax
import jax.numpy as jnp
from jax.experimental import pallas as pl
from jax.experimental.pallas import tpu as pltpu


# ---------------------------------------------------------------------------
# helpers
# ---------------------------------------------------------------------------
def _pick_tile(d, target, align):
    """Largest tile <= target that divides d and is a multiple of `align`.
    Falls back to the full dimension (full-dim blocks are always legal)."""
    if d <= target:
        return d
    t = (target // align) * align
    while t >= align:
        if d % t == 0:
            return t
        t -= align
    return d


# ---------------------------------------------------------------------------
# Tiled matmul kernel (used for the to_kv RxR-conv-as-patch-matmul)
# ---------------------------------------------------------------------------
def _matmul_kernel(a_ref, b_ref, o_ref, acc_ref):
    @pl.when(pl.program_id(2) == 0)
    def _():
        acc_ref[...] = jnp.zeros_like(acc_ref)

    acc_ref[...] += jnp.dot(
        a_ref[...], b_ref[...], preferred_element_type=jnp.float32
    )

    @pl.when(pl.program_id(2) == pl.num_programs(2) - 1)
    def _():
        o_ref[...] = acc_ref[...].astype(o_ref.dtype)


def pallas_matmul(a, b, *, out_dtype=jnp.bfloat16, tm=256, tn=256, tk=256):
    """o = a @ b with a real pipelined grid and f32 accumulation."""
    M, K = a.shape
    K2, N = b.shape
    assert K == K2
    tm = _pick_tile(M, tm, 8)
    tn = _pick_tile(N, tn, 128)
    tk = _pick_tile(K, tk, 128)
    grid = (M // tm, N // tn, K // tk)
    return pl.pallas_call(
        _matmul_kernel,
        out_shape=jax.ShapeDtypeStruct((M, N), out_dtype),
        grid_spec=pltpu.PrefetchScalarGridSpec(
            num_scalar_prefetch=0,
            grid=grid,
            in_specs=[
                pl.BlockSpec((tm, tk), lambda i, j, k: (i, k)),
                pl.BlockSpec((tk, tn), lambda i, j, k: (k, j)),
            ],
            out_specs=pl.BlockSpec((tm, tn), lambda i, j, k: (i, j)),
            scratch_shapes=[pltpu.VMEM((tm, tn), jnp.float32)],
        ),
        compiler_params=pltpu.CompilerParams(
            dimension_semantics=("parallel", "parallel", "arbitrary")
        ),
    )(a, b)


# ---------------------------------------------------------------------------
# Fused  to_q  +  attention  +  to_out  kernel
#   grid = (batch, query_tiles, heads); heads is the (arbitrary) reduction axis
#   for the to_out accumulation, so it goes last.
# ---------------------------------------------------------------------------
def _fused_attn_kernel(x_ref, wq_ref, k_ref, v_ref, wout_ref, o_ref, acc_ref,
                       *, valid_m):
    h = pl.program_id(2)

    @pl.when(h == 0)
    def _():
        acc_ref[...] = jnp.zeros_like(acc_ref)

    x = x_ref[0]                                            # (tq, C)   bf16
    # to_q for this head; softmax scale already folded into the weight.
    q = jnp.dot(x, wq_ref[0], preferred_element_type=jnp.float32)   # (tq, hd) f32

    # sim = q @ K^T ; K is stored pre-transposed (hd, Mpad) -> lane dim = keys.
    sim = jnp.dot(q.astype(x.dtype), k_ref[0, 0],
                  preferred_element_type=jnp.float32)               # (tq, Mpad) f32

    m_pad = sim.shape[-1]
    if m_pad != valid_m:  # static: mask keys beyond Hr*Wr (zero-padded)
        col = jax.lax.broadcasted_iota(jnp.int32, sim.shape, 1)
        sim = jnp.where(col < valid_m, sim, -1e30)

    # softmax in f32; reciprocal goes to the EUP slot.
    mx = jnp.max(sim, axis=-1, keepdims=True)
    p = jnp.exp(sim - mx)
    l = jnp.sum(p, axis=-1, keepdims=True)
    attn = p * pl.reciprocal(l, approx=True)

    # out_h = attn @ V, then this head's slice of to_out, accumulated in f32.
    oh = jnp.dot(attn.astype(x.dtype), v_ref[0, 0],
                 preferred_element_type=jnp.float32)                # (tq, hd)
    acc_ref[...] += jnp.dot(oh.astype(x.dtype), wout_ref[0],
                            preferred_element_type=jnp.float32)     # (tq, dim)

    @pl.when(h == pl.num_programs(2) - 1)
    def _():
        o_ref[0] = acc_ref[...].astype(o_ref.dtype)


def pallas_fused_attention(x_tok, wq_h, kt, vt, wout_h, *, valid_m, tq_target=128):
    """x_tok: (B, N, C); wq_h: (heads, C, hd); kt: (B, heads, hd, Mpad);
    vt: (B, heads, Mpad, hd); wout_h: (heads, hd, dim) -> (B, N, dim) f32."""
    B, N, C = x_tok.shape
    heads, _, hd = wq_h.shape
    m_pad = kt.shape[-1]
    dim = wout_h.shape[-1]
    tq = _pick_tile(N, tq_target, 8)
    grid = (B, N // tq, heads)

    kern = functools.partial(_fused_attn_kernel, valid_m=valid_m)
    return pl.pallas_call(
        kern,
        out_shape=jax.ShapeDtypeStruct((B, N, dim), jnp.float32),
        grid_spec=pltpu.PrefetchScalarGridSpec(
            num_scalar_prefetch=0,
            grid=grid,
            in_specs=[
                pl.BlockSpec((1, tq, C), lambda b, qi, h: (b, qi, 0)),        # x
                pl.BlockSpec((1, C, hd), lambda b, qi, h: (h, 0, 0)),         # Wq head
                pl.BlockSpec((1, 1, hd, m_pad), lambda b, qi, h: (b, h, 0, 0)),  # K^T
                pl.BlockSpec((1, 1, m_pad, hd), lambda b, qi, h: (b, h, 0, 0)),  # V
                pl.BlockSpec((1, hd, dim), lambda b, qi, h: (h, 0, 0)),       # Wout head
            ],
            out_specs=pl.BlockSpec((1, tq, dim), lambda b, qi, h: (b, qi, 0)),
            scratch_shapes=[pltpu.VMEM((tq, dim), jnp.float32)],
        ),
        compiler_params=pltpu.CompilerParams(
            dimension_semantics=("parallel", "parallel", "arbitrary")
        ),
    )(x_tok, wq_h, kt, vt, wout_h)


# ---------------------------------------------------------------------------
# Forward pass (layout glue in plain JAX, hot paths in Pallas)
# ---------------------------------------------------------------------------
def efficient_self_attention(x, wq, wkv, wout, *, heads, reduction_ratio,
                             compute_dtype=jnp.bfloat16):
    # x: (B, C, H, W) NCHW; wq/wout: (dim, dim, 1, 1); wkv: (2*dim, dim, R, R)
    B, C, H, W = x.shape
    R = reduction_ratio
    dim = C
    assert dim % heads == 0
    hd = dim // heads
    scale = float(hd) ** -0.5
    Hr, Wr = H // R, W // R
    N = H * W
    Mr = Hr * Wr
    m_pad = ((Mr + 127) // 128) * 128

    xc = x.astype(compute_dtype)

    # --- to_kv: RxR kernel, stride-R conv == per-patch matmul (Pallas, tiled) ---
    # TODO(synk): the im2col patch extraction / NCHW->tokens transposes below are
    # plain-JAX layout glue feeding the kernels.
    patches = xc.reshape(B, C, Hr, R, Wr, R)
    patches = jnp.transpose(patches, (0, 2, 4, 1, 3, 5)).reshape(B * Mr, C * R * R)
    wkv_t = wkv.reshape(2 * dim, C * R * R).T.astype(compute_dtype)
    kv_tok = pallas_matmul(patches, wkv_t, out_dtype=compute_dtype)   # (B*Mr, 2*dim)

    # head split done by reshape only; K pre-transposed so no in-kernel transpose.
    k_tok = kv_tok[:, :dim].reshape(B, Mr, heads, hd)
    v_tok = kv_tok[:, dim:].reshape(B, Mr, heads, hd)
    kt = jnp.transpose(k_tok, (0, 2, 3, 1))                           # (B, heads, hd, Mr)
    vt = jnp.transpose(v_tok, (0, 2, 1, 3))                           # (B, heads, Mr, hd)
    if m_pad != Mr:  # pad keys to a multiple of 128 lanes (masked in-kernel)
        kt = jnp.pad(kt, ((0, 0), (0, 0), (0, 0), (0, m_pad - Mr)))
        vt = jnp.pad(vt, ((0, 0), (0, 0), (0, m_pad - Mr), (0, 0)))

    # --- tokens (B, N, C) channels-last for the fused kernel --------------------
    x_tok = jnp.transpose(xc, (0, 2, 3, 1)).reshape(B, N, C)

    # --- per-head projection weights; softmax scale folded into Wq --------------
    wq_h = (wq.reshape(dim, dim) * scale).T.reshape(C, heads, hd)
    wq_h = jnp.transpose(wq_h, (1, 0, 2)).astype(compute_dtype)       # (heads, C, hd)
    wout_h = wout.reshape(dim, dim).T.reshape(heads, hd, dim).astype(compute_dtype)

    # --- fused to_q + attention + to_out ----------------------------------------
    y_tok = pallas_fused_attention(x_tok, wq_h, kt, vt, wout_h, valid_m=Mr)  # (B,N,dim) f32

    return jnp.transpose(y_tok.reshape(B, H, W, dim), (0, 3, 1, 2))   # (B, dim, H, W)


# ---------------------------------------------------------------------------
# Pure-JAX f32 reference (for correctness check)
# ---------------------------------------------------------------------------
def ref_forward(x, wq, wkv, wout, *, heads, reduction_ratio):
    B, C, H, W = x.shape
    R = reduction_ratio
    dim = C
    hd = dim // heads
    scale = float(hd) ** -0.5
    Hr, Wr = H // R, W // R

    x_tok = jnp.transpose(x, (0, 2, 3, 1)).reshape(B * H * W, C)
    q_tok = x_tok @ wq.reshape(dim, dim).T
    patches = x.reshape(B, C, Hr, R, Wr, R)
    patches = jnp.transpose(patches, (0, 2, 4, 1, 3, 5)).reshape(B * Hr * Wr, C * R * R)
    kv_tok = patches @ wkv.reshape(2 * dim, C * R * R).T
    k_tok, v_tok = kv_tok[:, :dim], kv_tok[:, dim:]

    def split(t, seq):
        return jnp.transpose(t.reshape(B, seq, heads, hd), (0, 2, 1, 3)).reshape(
            B * heads, seq, hd
        )

    q, k, v = split(q_tok, H * W), split(k_tok, Hr * Wr), split(v_tok, Hr * Wr)
    sim = jnp.einsum("bid,bjd->bij", q, k) * scale
    attn = jax.nn.softmax(sim, axis=-1)
    o = jnp.einsum("bij,bjd->bid", attn, v)
    o_tok = jnp.transpose(o.reshape(B, heads, H * W, hd), (0, 2, 1, 3)).reshape(
        B * H * W, dim
    )
    y_tok = o_tok @ wout.reshape(dim, dim).T
    return jnp.transpose(y_tok.reshape(B, H, W, dim), (0, 3, 1, 2))


# ---------------------------------------------------------------------------
if __name__ == "__main__":
    B, dim, H, W = 2, 32, 16, 16
    heads, R = 4, 2

    key = jax.random.PRNGKey(0)
    kx, kq, kkv, ko = jax.random.split(key, 4)
    x = jax.random.normal(kx, (B, dim, H, W), jnp.float32)
    # Conv2d weight layouts: (out_ch, in_ch, kh, kw)
    wq = jax.random.normal(kq, (dim, dim, 1, 1), jnp.float32) * 0.1
    wkv = jax.random.normal(kkv, (2 * dim, dim, R, R), jnp.float32) * 0.1
    wout = jax.random.normal(ko, (dim, dim, 1, 1), jnp.float32) * 0.1

    fwd = jax.jit(
        functools.partial(efficient_self_attention, heads=heads, reduction_ratio=R)
    )
    out = jax.block_until_ready(fwd(x, wq, wkv, wout))

    ref = ref_forward(x, wq, wkv, wout, heads=heads, reduction_ratio=R)
    assert out.shape == (B, dim, H, W)
    max_err = float(jnp.max(jnp.abs(out - ref)))
    # bf16 MXU operands (f32 accumulation) vs f32 reference -> loosened tolerance.
    assert jnp.allclose(out, ref, atol=5e-2, rtol=5e-2), max_err

    print("KERNEL_OK")
</pallas_src>

<mosaic_0001>
module attributes {stable_mosaic.version = 11 : i64} {
  func.func @_matmul_kernel(%arg0: i32, %arg1: i32, %arg2: i32, %arg3: memref<128x128xbf16, #tpu.memory_space<vmem>>, %arg4: memref<128x64xbf16, #tpu.memory_space<vmem>>, %arg5: memref<128x64xbf16, #tpu.memory_space<vmem>>, %arg6: memref<128x64xf32, #tpu.memory_space<vmem>>) attributes {dimension_semantics = [#tpu.dimension_semantics<parallel>, #tpu.dimension_semantics<parallel>, #tpu.dimension_semantics<arbitrary>], iteration_bounds = array<i64: 1, 1, 1>, scalar_prefetch = 0 : i64, scratch_operands = 1 : i64, tpu.core_type = #tpu.core_type<tc>, window_params = [{transform_indices = @transform_0, window_bounds = array<i64: 128, 128>}, {transform_indices = @transform_1, window_bounds = array<i64: 128, 64>}, {transform_indices = @transform_2, window_bounds = array<i64: 128, 64>}]} {
    %c0_i32 = arith.constant 0 : i32
    %0 = arith.cmpi eq, %arg2, %c0_i32 : i32
    %1 = arith.extui %0 : i1 to i32
    %c0_i32_0 = arith.constant 0 : i32
    %2 = arith.cmpi ne, %1, %c0_i32_0 : i32
    scf.if %2 {
      %cst_10 = arith.constant 0.000000e+00 : f32
      %12 = vector.broadcast %cst_10 : f32 to vector<128x64xf32>
      %c0_11 = arith.constant 0 : index
      %c0_12 = arith.constant 0 : index
      %13 = vector.load %arg6[%c0_11, %c0_12] : memref<128x64xf32, #tpu.memory_space<vmem>>, vector<128x64xf32>
      tpu.vector_store %arg6[%c0_11, %c0_12], %12 {strides = array<i32>} : memref<128x64xf32, #tpu.memory_space<vmem>>, vector<128x64xf32>,
    } else {
    }
    %c0 = arith.constant 0 : index
    %c0_1 = arith.constant 0 : index
    %3 = vector.load %arg6[%c0, %c0_1] : memref<128x64xf32, #tpu.memory_space<vmem>>, vector<128x64xf32>
    %c0_2 = arith.constant 0 : index
    %c0_3 = arith.constant 0 : index
    %4 = vector.load %arg3[%c0_2, %c0_3] : memref<128x128xbf16, #tpu.memory_space<vmem>>, vector<128x128xbf16>
    %c0_4 = arith.constant 0 : index
    %c0_5 = arith.constant 0 : index
    %5 = vector.load %arg4[%c0_4, %c0_5] : memref<128x64xbf16, #tpu.memory_space<vmem>>, vector<128x64xbf16>
    %cst = arith.constant dense<0.000000e+00> : vector<128x64xf32>
    %6 = tpu.matmul %4, %5, %cst {dimension_numbers = #tpu.dot_dimension_numbers<[1], [0], [0], [1], [0, 0, 1, 1], [], []>} : vector<128x128xbf16>, vector<128x64xbf16>, vector<128x64xf32> -> vector<128x64xf32>
    %7 = arith.addf %3, %6 : vector<128x64xf32>
    %c0_6 = arith.constant 0 : index
    %c0_7 = arith.constant 0 : index
    %8 = vector.load %arg6[%c0_6, %c0_7] : memref<128x64xf32, #tpu.memory_space<vmem>>, vector<128x64xf32>
    tpu.vector_store %arg6[%c0_6, %c0_7], %7 {strides = array<i32>} : memref<128x64xf32, #tpu.memory_space<vmem>>, vector<128x64xf32>,
    %c0_i32_8 = arith.constant 0 : i32
    %9 = arith.cmpi eq, %arg2, %c0_i32_8 : i32
    %10 = arith.extui %9 : i1 to i32
    %c0_i32_9 = arith.constant 0 : i32
    %11 = arith.cmpi ne, %10, %c0_i32_9 : i32
    scf.if %11 {
      %c0_10 = arith.constant 0 : index
      %c0_11 = arith.constant 0 : index
      %12 = vector.load %arg6[%c0_10, %c0_11] : memref<128x64xf32, #tpu.memory_space<vmem>>, vector<128x64xf32>
      %13 = arith.truncf %12 : vector<128x64xf32> to vector<128x64xbf16>
      %c0_12 = arith.constant 0 : index
      %c0_13 = arith.constant 0 : index
      %14 = vector.load %arg5[%c0_12, %c0_13] : memref<128x64xbf16, #tpu.memory_space<vmem>>, vector<128x64xbf16>
      tpu.vector_store %arg5[%c0_12, %c0_13], %13 {strides = array<i32>} : memref<128x64xbf16, #tpu.memory_space<vmem>>, vector<128x64xbf16>,
    } else {
    }
    return
  }
  func.func @transform_0(%arg0: i32, %arg1: i32, %arg2: i32) -> (i32, i32) {
    %c0_i32 = arith.constant 0 : i32
    return %arg0, %arg2 : i32, i32
  }
  func.func @transform_1(%arg0: i32, %arg1: i32, %arg2: i32) -> (i32, i32) {
    %c0_i32 = arith.constant 0 : i32
    return %arg2, %arg1 : i32, i32
  }
  func.func @transform_2(%arg0: i32, %arg1: i32, %arg2: i32) -> (i32, i32) {
    %c0_i32 = arith.constant 0 : i32
    return %arg0, %arg1 : i32, i32
  }
}

module attributes {stable_mosaic.version = 11 : i64} {
  func.func @_fused_attn_kernel(%arg0: i32, %arg1: i32, %arg2: i32, %arg3: memref<1x128x32xbf16, #tpu.memory_space<vmem>>, %arg4: memref<1x32x8xbf16, #tpu.memory_space<vmem>>, %arg5: memref<1x1x8x128xbf16, #tpu.memory_space<vmem>>, %arg6: memref<1x1x128x8xbf16, #tpu.memory_space<vmem>>, %arg7: memref<1x8x32xbf16, #tpu.memory_space<vmem>>, %arg8: memref<1x128x32xf32, #tpu.memory_space<vmem>>, %arg9: memref<128x32xf32, #tpu.memory_space<vmem>>) attributes {dimension_semantics = [#tpu.dimension_semantics<parallel>, #tpu.dimension_semantics<parallel>, #tpu.dimension_semantics<arbitrary>], iteration_bounds = array<i64: 2, 2, 4>, scalar_prefetch = 0 : i64, scratch_operands = 1 : i64, tpu.core_type = #tpu.core_type<tc>, window_params = [{transform_indices = @transform_0, window_bounds = array<i64: 1, 128, 32>}, {transform_indices = @transform_1, window_bounds = array<i64: 1, 32, 8>}, {transform_indices = @transform_2, window_bounds = array<i64: 1, 1, 8, 128>}, {transform_indices = @transform_3, window_bounds = array<i64: 1, 1, 128, 8>}, {transform_indices = @transform_4, window_bounds = array<i64: 1, 8, 32>}, {transform_indices = @transform_5, window_bounds = array<i64: 1, 128, 32>}]} {
    %c0_i32 = arith.constant 0 : i32
    %0 = arith.cmpi eq, %arg2, %c0_i32 : i32
    %1 = arith.extui %0 : i1 to i32
    %c0_i32_0 = arith.constant 0 : i32
    %2 = arith.cmpi ne, %1, %c0_i32_0 : i32
    scf.if %2 {
      %cst_28 = arith.constant 0.000000e+00 : f32
      %41 = vector.broadcast %cst_28 : f32 to vector<128x32xf32>
      %c0_29 = arith.constant 0 : index
      %c0_30 = arith.constant 0 : index
      %42 = vector.load %arg9[%c0_29, %c0_30] : memref<128x32xf32, #tpu.memory_space<vmem>>, vector<128x32xf32>
      tpu.vector_store %arg9[%c0_29, %c0_30], %41 {strides = array<i32>} : memref<128x32xf32, #tpu.memory_space<vmem>>, vector<128x32xf32>,
    } else {
    }
    %c0 = arith.constant 0 : index
    %c0_1 = arith.constant 0 : index
    %c0_2 = arith.constant 0 : index
    %3 = vector.load %arg3[%c0, %c0_1, %c0_2] : memref<1x128x32xbf16, #tpu.memory_space<vmem>>, vector<1x128x32xbf16>
    %4 = vector.shape_cast %3 : vector<1x128x32xbf16> to vector<128x32xbf16>
    %c0_3 = arith.constant 0 : index
    %c0_4 = arith.constant 0 : index
    %c0_5 = arith.constant 0 : index
    %5 = vector.load %arg4[%c0_3, %c0_4, %c0_5] : memref<1x32x8xbf16, #tpu.memory_space<vmem>>, vector<1x32x8xbf16>
    %6 = vector.shape_cast %5 : vector<1x32x8xbf16> to vector<32x8xbf16>
    %cst = arith.constant dense<0.000000e+00> : vector<128x8xf32>
    %7 = tpu.matmul %4, %6, %cst {dimension_numbers = #tpu.dot_dimension_numbers<[1], [0], [0], [1], [0, 0, 1, 1], [], []>} : vector<128x32xbf16>, vector<32x8xbf16>, vector<128x8xf32> -> vector<128x8xf32>
    %8 = arith.truncf %7 : vector<128x8xf32> to vector<128x8xbf16>
    %c0_6 = arith.constant 0 : index
    %c0_7 = arith.constant 0 : index
    %c0_8 = arith.constant 0 : index
    %c0_9 = arith.constant 0 : index
    %9 = vector.load %arg5[%c0_6, %c0_7, %c0_8, %c0_9] : memref<1x1x8x128xbf16, #tpu.memory_space<vmem>>, vector<1x1x8x128xbf16>
    %10 = vector.shape_cast %9 : vector<1x1x8x128xbf16> to vector<8x128xbf16>
    %cst_10 = arith.constant dense<0.000000e+00> : vector<128x128xf32>
    %11 = tpu.matmul %8, %10, %cst_10 {dimension_numbers = #tpu.dot_dimension_numbers<[1], [0], [0], [1], [0, 0, 1, 1], [], []>} : vector<128x8xbf16>, vector<8x128xbf16>, vector<128x128xf32> -> vector<128x128xf32>
    %12 = tpu.iota {dimensions = array<i32: 1>} : vector<128x128xi32>
    %c64_i32 = arith.constant 64 : i32
    %13 = vector.broadcast %c64_i32 : i32 to vector<128x128xi32>
    %14 = arith.cmpi slt, %12, %13 : vector<128x128xi32>
    %cst_11 = arith.constant -1.000000e+30 : f32
    %15 = vector.broadcast %cst_11 : f32 to vector<128x128xf32>
    %16 = arith.select %14, %11, %15 : vector<128x128xi1>, vector<128x128xf32>
    %cst_12 = arith.constant dense<0xFF800000> : vector<128xf32>
    %17 = vector.multi_reduction <maximumf>, %16, %cst_12 [1] : vector<128x128xf32> to vector<128xf32>
    %18 = vector.shape_cast %17 : vector<128xf32> to vector<128x1xf32>
    %19 = vector.broadcast %18 : vector<128x1xf32> to vector<128x128xf32>
    %20 = arith.subf %16, %19 : vector<128x128xf32>
    %21 = math.exp %20 : vector<128x128xf32>
    %cst_13 = arith.constant dense<0.000000e+00> : vector<128xf32>
    %22 = vector.multi_reduction <add>, %21, %cst_13 [1] : vector<128x128xf32> to vector<128xf32>
    %23 = vector.shape_cast %22 : vector<128xf32> to vector<128x1xf32>
    %24 = tpu.reciprocal %23 {approx = true} : vector<128x1xf32> -> vector<128x1xf32>
    %25 = vector.broadcast %24 : vector<128x1xf32> to vector<128x128xf32>
    %26 = arith.mulf %21, %25 : vector<128x128xf32>
    %27 = arith.truncf %26 : vector<128x128xf32> to vector<128x128xbf16>
    %c0_14 = arith.constant 0 : index
    %c0_15 = arith.constant 0 : index
    %c0_16 = arith.constant 0 : index
    %c0_17 = arith.constant 0 : index
    %28 = vector.load %arg6[%c0_14, %c0_15, %c0_16, %c0_17] : memref<1x1x128x8xbf16, #tpu.memory_space<vmem>>, vector<1x1x128x8xbf16>
    %29 = vector.shape_cast %28 : vector<1x1x128x8xbf16> to vector<128x8xbf16>
    %cst_18 = arith.constant dense<0.000000e+00> : vector<128x8xf32>
    %30 = tpu.matmul %27, %29, %cst_18 {dimension_numbers = #tpu.dot_dimension_numbers<[1], [0], [0], [1], [0, 0, 1, 1], [], []>} : vector<128x128xbf16>, vector<128x8xbf16>, vector<128x8xf32> -> vector<128x8xf32>
    %c0_19 = arith.constant 0 : index
    %c0_20 = arith.constant 0 : index
    %31 = vector.load %arg9[%c0_19, %c0_20] : memref<128x32xf32, #tpu.memory_space<vmem>>, vector<128x32xf32>
    %32 = arith.truncf %30 : vector<128x8xf32> to vector<128x8xbf16>
    %c0_21 = arith.constant 0 : index
    %c0_22 = arith.constant 0 : index
    %c0_23 = arith.constant 0 : index
    %33 = vector.load %arg7[%c0_21, %c0_22, %c0_23] : memref<1x8x32xbf16, #tpu.memory_space<vmem>>, vector<1x8x32xbf16>
    %34 = vector.shape_cast %33 : vector<1x8x32xbf16> to vector<8x32xbf16>
    %cst_24 = arith.constant dense<0.000000e+00> : vector<128x32xf32>
    %35 = tpu.matmul %32, %34, %cst_24 {dimension_numbers = #tpu.dot_dimension_numbers<[1], [0], [0], [1], [0, 0, 1, 1], [], []>} : vector<128x8xbf16>, vector<8x32xbf16>, vector<128x32xf32> -> vector<128x32xf32>
    %36 = arith.addf %31, %35 : vector<128x32xf32>
    %c0_25 = arith.constant 0 : index
    %c0_26 = arith.constant 0 : index
    %37 = vector.load %arg9[%c0_25, %c0_26] : memref<128x32xf32, #tpu.memory_space<vmem>>, vector<128x32xf32>
    tpu.vector_store %arg9[%c0_25, %c0_26], %36 {strides = array<i32>} : memref<128x32xf32, #tpu.memory_space<vmem>>, vector<128x32xf32>,
    %c3_i32 = arith.constant 3 : i32
    %38 = arith.cmpi eq, %arg2, %c3_i32 : i32
    %39 = arith.extui %38 : i1 to i32
    %c0_i32_27 = arith.constant 0 : i32
    %40 = arith.cmpi ne, %39, %c0_i32_27 : i32
    scf.if %40 {
      %c0_28 = arith.constant 0 : index
      %c0_29 = arith.constant 0 : index
      %41 = vector.load %arg9[%c0_28, %c0_29] : memref<128x32xf32, #tpu.memory_space<vmem>>, vector<128x32xf32>
      %c0_30 = arith.constant 0 : index
      %c0_31 = arith.constant 0 : index
      %c0_32 = arith.constant 0 : index
      %42 = vector.load %arg8[%c0_30, %c0_31, %c0_32] : memref<1x128x32xf32, #tpu.memory_space<vmem>>, vector<1x128x32xf32>
      %43 = vector.shape_cast %42 : vector<1x128x32xf32> to vector<128x32xf32>
      %44 = vector.shape_cast %41 : vector<128x32xf32> to vector<1x128x32xf32>
      tpu.vector_store %arg8[%c0_30, %c0_31, %c0_32], %44 {strides = array<i32>} : memref<1x128x32xf32, #tpu.memory_space<vmem>>, vector<1x128x32xf32>,
    } else {
    }
    return
  }
  func.func @transform_0(%arg0: i32, %arg1: i32, %arg2: i32) -> (i32, i32, i32) {
    %c0_i32 = arith.constant 0 : i32
    %c0_i32_0 = arith.constant 0 : i32
    return %arg0, %arg1, %c0_i32 : i32, i32, i32
  }
  func.func @transform_1(%arg0: i32, %arg1: i32, %arg2: i32) -> (i32, i32, i32) {
    %c0_i32 = arith.constant 0 : i32
    %c0_i32_0 = arith.constant 0 : i32
    %c0_i32_1 = arith.constant 0 : i32
    return %arg2, %c0_i32, %c0_i32_0 : i32, i32, i32
  }
  func.func @transform_2(%arg0: i32, %arg1: i32, %arg2: i32) -> (i32, i32, i32, i32) {
    %c0_i32 = arith.constant 0 : i32
    %c0_i32_0 = arith.constant 0 : i32
    %c0_i32_1 = arith.constant 0 : i32
    return %arg0, %arg2, %c0_i32, %c0_i32_0 : i32, i32, i32, i32
  }
  func.func @transform_3(%arg0: i32, %arg1: i32, %arg2: i32) -> (i32, i32, i32, i32) {
    %c0_i32 = arith.constant 0 : i32
    %c0_i32_0 = arith.constant 0 : i32
    %c0_i32_1 = arith.constant 0 : i32
    return %arg0, %arg2, %c0_i32, %c0_i32_0 : i32, i32, i32, i32
  }
  func.func @transform_4(%arg0: i32, %arg1: i32, %arg2: i32) -> (i32, i32, i32) {
    %c0_i32 = arith.constant 0 : i32
    %c0_i32_0 = arith.constant 0 : i32
    %c0_i32_1 = arith.constant 0 : i32
    return %arg2, %c0_i32, %c0_i32_0 : i32, i32, i32
  }
  func.func @transform_5(%arg0: i32, %arg1: i32, %arg2: i32) -> (i32, i32, i32) {
    %c0_i32 = arith.constant 0 : i32
    %c0_i32_0 = arith.constant 0 : i32
    return %arg0, %arg1, %c0_i32 : i32, i32, i32
  }
}

</mosaic_0001>

<llo_original>
// kernel: efficient_self_attention.2
$region0: #{efficient_self_attention.2}
  #allocation0 [shape = 'u32[]', space=smem, size = 0x4, offset = 0x4, fixed_abs, tag = 'smem constant byte address 0x4 - core index']
  #allocation1 [shape = 'u32[144,128]{1,0:T(1,128)}', space=vmem, size = 0x12000, scoped, tag = 'internal scratch']
  #allocation2 [shape = 'f32[128,64]{1,0:T(8,128)}', space=vmem, size = 0x10000, scoped, tag = 'scratch operand']
  %s0 = inlined_call_operand.vmem [shape: bf16[128,128], index: 0, kind: input, shape index: {}]
  %s1 = inlined_call_operand.vmem [shape: bf16[128,64], index: 1, kind: input, shape index: {}]
  %s2 = inlined_call_operand.vmem [shape: bf16[128,64], index: 2, kind: output, shape index: {}]
  %s3 = sld [smem:[#allocation0]]
  $region26: #{efficient_self_attention.2} parent=0
    _
  %s5 = ssub.s32 1, %s3
  %s6 = scalar_select 0, %s5, %s3
  // Predicated region
  $region2: #{efficient_self_attention.2} parent=0 // pred_check
    _
  $region3: #{efficient_self_attention.2} parent=0 // pred_check_branch
    %8 = sbr.rel (0) target = $region5
  $region4: #{efficient_self_attention.2} parent=0 // pred_region
    _
  $region5: #{efficient_self_attention.2} parent=0 // pred_fallthru
    _
  // Predicated region
  $region6: #{efficient_self_attention.2} parent=0 // pred_check
    _
  $region7: #{efficient_self_attention.2} parent=0 // pred_check_branch
    %10 = sbr.rel (0) target = $region9
  $region8: #{efficient_self_attention.2} parent=0 // pred_region
    _
  $region9: #{efficient_self_attention.2} parent=0 // pred_fallthru
    _
  %p12 = scmp.eq.s32.totalorder 0, 0
  // Predicated region
  $region10: #{efficient_self_attention.2} parent=0 // pred_check
    %p13 = pneg %p12
  $region11: #{efficient_self_attention.2} parent=0 // pred_check_branch
    %15 = sbr.rel (%p13) target = $region13
  $region12: #{efficient_self_attention.2} parent=0 // pred_region
    %vm16 = vcmask 523264
    %17 = vst.msk [vmem:[#allocation2] sm:$0xff] %vm16, 0.0
    %18 = vst.msk [vmem:[#allocation2 + $0x8] sm:$0xff] %vm16, 0.0
    %19 = vst.msk [vmem:[#allocation2 + $0x10] sm:$0xff] %vm16, 0.0
    %20 = vst.msk [vmem:[#allocation2 + $0x18] sm:$0xff] %vm16, 0.0
    %21 = vst.msk [vmem:[#allocation2 + $0x20] sm:$0xff] %vm16, 0.0
    %22 = vst.msk [vmem:[#allocation2 + $0x28] sm:$0xff] %vm16, 0.0
    %23 = vst.msk [vmem:[#allocation2 + $0x30] sm:$0xff] %vm16, 0.0
    %24 = vst.msk [vmem:[#allocation2 + $0x38] sm:$0xff] %vm16, 0.0
    %25 = vst.msk [vmem:[#allocation2 + $0x40] sm:$0xff] %vm16, 0.0
    %26 = vst.msk [vmem:[#allocation2 + $0x48] sm:$0xff] %vm16, 0.0
    %27 = vst.msk [vmem:[#allocation2 + $0x50] sm:$0xff] %vm16, 0.0
    %28 = vst.msk [vmem:[#allocation2 + $0x58] sm:$0xff] %vm16, 0.0
    %29 = vst.msk [vmem:[#allocation2 + $0x60] sm:$0xff] %vm16, 0.0
    %30 = vst.msk [vmem:[#allocation2 + $0x68] sm:$0xff] %vm16, 0.0
    %31 = vst.msk [vmem:[#allocation2 + $0x70] sm:$0xff] %vm16, 0.0
    %32 = vst.msk [vmem:[#allocation2 + $0x78] sm:$0xff] %vm16, 0.0
  $region13: #{efficient_self_attention.2} parent=0 // pred_fallthru
    _
  %v33 = vld [vmem:[#allocation2] sm:$0xff]
  %v34 = vld [vmem:[#allocation2 + $0x8] sm:$0xff]
  %v35 = vld [vmem:[#allocation2 + $0x10] sm:$0xff]
  %v36 = vld [vmem:[#allocation2 + $0x18] sm:$0xff]
  %v37 = vld [vmem:[#allocation2 + $0x20] sm:$0xff]
  %v38 = vld [vmem:[#allocation2 + $0x28] sm:$0xff]
  %v39 = vld [vmem:[#allocation2 + $0x30] sm:$0xff]
  %v40 = vld [vmem:[#allocation2 + $0x38] sm:$0xff]
  %v41 = vld [vmem:[#allocation2 + $0x40] sm:$0xff]
  %v42 = vld [vmem:[#allocation2 + $0x48] sm:$0xff]
  %v43 = vld [vmem:[#allocation2 + $0x50] sm:$0xff]
  %v44 = vld [vmem:[#allocation2 + $0x58] sm:$0xff]
  %v45 = vld [vmem:[#allocation2 + $0x60] sm:$0xff]
  %v46 = vld [vmem:[#allocation2 + $0x68] sm:$0xff]
  %v47 = vld [vmem:[#allocation2 + $0x70] sm:$0xff]
  %v48 = vld [vmem:[#allocation2 + $0x78] sm:$0xff]
  %v49 = vld [vmem:[%s0] sm:$0xf]
  %v50 = vld [vmem:[%s0 + $0x4] sm:$0xf]
  %v51 = vld [vmem:[%s0 + $0x8] sm:$0xf]
  %v52 = vld [vmem:[%s0 + $0xc] sm:$0xf]
  %v53 = vld [vmem:[%s0 + $0x10] sm:$0xf]
  %v54 = vld [vmem:[%s0 + $0x14] sm:$0xf]
  %v55 = vld [vmem:[%s0 + $0x18] sm:$0xf]
  %v56 = vld [vmem:[%s0 + $0x1c] sm:$0xf]
  %v57 = vld [vmem:[%s0 + $0x20] sm:$0xf]
  %v58 = vld [vmem:[%s0 + $0x24] sm:$0xf]
  %v59 = vld [vmem:[%s0 + $0x28] sm:$0xf]
  %v60 = vld [vmem:[%s0 + $0x2c] sm:$0xf]
  %v61 = vld [vmem:[%s0 + $0x30] sm:$0xf]
  %v62 = vld [vmem:[%s0 + $0x34] sm:$0xf]
  %v63 = vld [vmem:[%s0 + $0x38] sm:$0xf]
  %v64 = vld [vmem:[%s0 + $0x3c] sm:$0xf]
  %v65 = vld [vmem:[%s1] sm:$0xf]
  %v66 = vld [vmem:[%s1 + $0x4] sm:$0xf]
  %v67 = vld [vmem:[%s1 + $0x8] sm:$0xf]
  %v68 = vld [vmem:[%s1 + $0xc] sm:$0xf]
  %v69 = vld [vmem:[%s1 + $0x10] sm:$0xf]
  %v70 = vld [vmem:[%s1 + $0x14] sm:$0xf]
  %v71 = vld [vmem:[%s1 + $0x18] sm:$0xf]
  %v72 = vld [vmem:[%s1 + $0x1c] sm:$0xf]
  %v73 = vld [vmem:[%s1 + $0x20] sm:$0xf]
  %v74 = vld [vmem:[%s1 + $0x24] sm:$0xf]
  %v75 = vld [vmem:[%s1 + $0x28] sm:$0xf]
  %v76 = vld [vmem:[%s1 + $0x2c] sm:$0xf]
  %v77 = vld [vmem:[%s1 + $0x30] sm:$0xf]
  %v78 = vld [vmem:[%s1 + $0x34] sm:$0xf]
  %v79 = vld [vmem:[%s1 + $0x38] sm:$0xf]
  %v80 = vld [vmem:[%s1 + $0x3c] sm:$0xf]
  %v97 = vunpack.c.l.b16 %v49
  %v98 = vunpack.c.l.b16 %v50
  %v99 = vunpack.c.l.b16 %v51
  %v100 = vunpack.c.l.b16 %v52
  %v101 = vunpack.c.l.b16 %v53
  %v102 = vunpack.c.l.b16 %v54
  %v103 = vunpack.c.l.b16 %v55
  %v104 = vunpack.c.l.b16 %v56
  %v105 = vunpack.c.l.b16 %v57
  %v106 = vunpack.c.l.b16 %v58
  %v107 = vunpack.c.l.b16 %v59
  %v108 = vunpack.c.l.b16 %v60
  %v109 = vunpack.c.l.b16 %v61
  %v110 = vunpack.c.l.b16 %v62
  %v111 = vunpack.c.l.b16 %v63
  %v112 = vunpack.c.l.b16 %v64
  %v113 = vpack.c.b16 %v98, %v97
  %v114 = vpack.c.b16 %v100, %v99
  %v115 = vpack.c.b16 %v102, %v101
  %v116 = vpack.c.b16 %v104, %v103
  %v117 = vpack.c.b16 %v106, %v105
  %v118 = vpack.c.b16 %v108, %v107
  %v119 = vpack.c.b16 %v110, %v109
  %v120 = vpack.c.b16 %v112, %v111
  %v145 = vunpack.c.l.b16 %v65
  %v146 = vunpack.c.l.b16 %v66
  %v147 = vunpack.c.l.b16 %v67
  %v148 = vunpack.c.l.b16 %v68
  %v149 = vunpack.c.l.b16 %v69
  %v150 = vunpack.c.l.b16 %v70
  %v151 = vunpack.c.l.b16 %v71
  %v152 = vunpack.c.l.b16 %v72
  %v153 = vunpack.c.l.b16 %v73
  %v154 = vunpack.c.l.b16 %v74
  %v155 = vunpack.c.l.b16 %v75
  %v156 = vunpack.c.l.b16 %v76
  %v157 = vunpack.c.l.b16 %v77
  %v158 = vunpack.c.l.b16 %v78
  %v159 = vunpack.c.l.b16 %v79
  %v160 = vunpack.c.l.b16 %v80
  %v161 = vpack.c.b16 %v146, %v145
  %v162 = vpack.c.b16 %v148, %v147
  %v163 = vpack.c.b16 %v150, %v149
  %v164 = vpack.c.b16 %v152, %v151
  %v165 = vpack.c.b16 %v154, %v153
  %v166 = vpack.c.b16 %v156, %v155
  %v167 = vpack.c.b16 %v158, %v157
  %v168 = vpack.c.b16 %v160, %v159
  %177 = vmatprep.subr.bf16.mxu0 0
  %178 = vmatpush1.bf16.msra.mxu0 %v161
  %179 = vmatprep.subr.bf16.mxu0 0
  %180 = vmatpush1.bf16.msra.mxu0 %v162
  %181 = vmatprep.subr.bf16.mxu0 0
  %182 = vmatpush1.bf16.msra.mxu0 %v163
  %183 = vmatprep.subr.bf16.mxu0 0
  %184 = vmatpush1.bf16.msra.mxu0 %v164
  %185 = vmatprep.subr.bf16.mxu0 0
  %186 = vmatpush1.bf16.msra.mxu0 %v165
  %187 = vmatprep.subr.bf16.mxu0 0
  %188 = vmatpush1.bf16.msra.mxu0 %v166
  %189 = vmatprep.subr.bf16.mxu0 0
  %190 = vmatpush1.bf16.msra.mxu0 %v167
  %191 = vmatprep.subr.bf16.mxu0 0
  %192 = vmatpush1.bf16.msra.mxu0 %v168
  %193 = vmatprep.subr.bf16.mxu0 0
  %194 = vmatpush1.bf16.msra.mxu0 0
  %195 = vmatprep.subr.bf16.mxu0 0
  %196 = vmatpush1.bf16.msra.mxu0 0
  %197 = vmatprep.subr.bf16.mxu0 0
  %198 = vmatpush1.bf16.msra.mxu0 0
  %199 = vmatprep.subr.bf16.mxu0 0
  %200 = vmatpush1.bf16.msra.mxu0 0
  %201 = vmatprep.subr.bf16.mxu0 0
  %202 = vmatpush1.bf16.msra.mxu0 0
  %203 = vmatprep.subr.bf16.mxu0 0
  %204 = vmatpush1.bf16.msra.mxu0 0
  %205 = vmatprep.subr.bf16.mxu0 0
  %206 = vmatpush1.bf16.msra.mxu0 0
  %207 = vmatprep.subr.bf16.mxu0 0
  %208 = vmatpush1.bf16.msra.mxu0 0
  %209 = vmatprep.mubr.bf16.mxu0 0
  %210 = vmatmul.mubr.bf16.gmra.mrb[0].mxu0 %v113
  %v211 = vpop.f32.mrb[0].mxu0
  %v212 = vadd.f32 0.0, %v211
  %v213 = vpop.f32.mrb[0].mxu0
  %v214 = vpop.f32.mrb[0].mxu0
  %v215 = vadd.f32 0.0, %v214
  %v216 = vpop.f32.mrb[0].mxu0
  %217 = vmatprep.mubr.bf16.mxu0 0
  %218 = vmatmul.mubr.bf16.gmra.mrb[0].mxu0 %v114
  %v219 = vpop.f32.mrb[0].mxu0
  %v220 = vadd.f32 0.0, %v219
  %v221 = vpop.f32.mrb[0].mxu0
  %v222 = vpop.f32.mrb[0].mxu0
  %v223 = vadd.f32 0.0, %v222
  %v224 = vpop.f32.mrb[0].mxu0
  %225 = vmatprep.mubr.bf16.mxu0 0
  %226 = vmatmul.mubr.bf16.gmra.mrb[0].mxu0 %v115
  %v227 = vpop.f32.mrb[0].mxu0
  %v228 = vadd.f32 0.0, %v227
  %v229 = vpop.f32.mrb[0].mxu0
  %v230 = vpop.f32.mrb[0].mxu0
  %v231 = vadd.f32 0.0, %v230
  %v232 = vpop.f32.mrb[0].mxu0
  %233 = vmatprep.mubr.bf16.mxu0 0
  %234 = vmatmul.mubr.bf16.gmra.mrb[0].mxu0 %v116
  %v235 = vpop.f32.mrb[0].mxu0
  %v236 = vadd.f32 0.0, %v235
  %v237 = vpop.f32.mrb[0].mxu0
  %v238 = vpop.f32.mrb[0].mxu0
  %v239 = vadd.f32 0.0, %v238
  %v240 = vpop.f32.mrb[0].mxu0
  %241 = vmatprep.mubr.bf16.mxu0 0
  %242 = vmatmul.mubr.bf16.gmra.mrb[0].mxu0 %v117
  %v243 = vpop.f32.mrb[0].mxu0
  %v244 = vadd.f32 0.0, %v243
  %v245 = vpop.f32.mrb[0].mxu0
  %v246 = vpop.f32.mrb[0].mxu0
  %v247 = vadd.f32 0.0, %v246
  %v248 = vpop.f32.mrb[0].mxu0
  %249 = vmatprep.mubr.bf16.mxu0 0
  %250 = vmatmul.mubr.bf16.gmra.mrb[0].mxu0 %v118
  %v251 = vpop.f32.mrb[0].mxu0
  %v252 = vadd.f32 0.0, %v251
  %v253 = vpop.f32.mrb[0].mxu0
  %v254 = vpop.f32.mrb[0].mxu0
  %v255 = vadd.f32 0.0, %v254
  %v256 = vpop.f32.mrb[0].mxu0
  %257 = vmatprep.mubr.bf16.mxu0 0
  %258 = vmatmul.mubr.bf16.gmra.mrb[0].mxu0 %v119
  %v259 = vpop.f32.mrb[0].mxu0
  %v260 = vadd.f32 0.0, %v259
  %v261 = vpop.f32.mrb[0].mxu0
  %v262 = vpop.f32.mrb[0].mxu0
  %v263 = vadd.f32 0.0, %v262
  %v264 = vpop.f32.mrb[0].mxu0
  %265 = vmatprep.mubr.bf16.mxu0 0
  %266 = vmatmul.mubr.bf16.gmra.mrb[0].mxu0 %v120
  %v267 = vpop.f32.mrb[0].mxu0
  %v268 = vadd.f32 0.0, %v267
  %v269 = vpop.f32.mrb[0].mxu0
  %v270 = vpop.f32.mrb[0].mxu0
  %v271 = vadd.f32 0.0, %v270
  %v272 = vpop.f32.mrb[0].mxu0
  %273 = vdwg.mxu0
  %v274 = vadd.f32 %v33, %v212
  %v275 = vadd.f32 %v34, %v215
  %v276 = vadd.f32 %v35, %v220
  %v277 = vadd.f32 %v36, %v223
  %v278 = vadd.f32 %v37, %v228
  %v279 = vadd.f32 %v38, %v231
  %v280 = vadd.f32 %v39, %v236
  %v281 = vadd.f32 %v40, %v239
  %v282 = vadd.f32 %v41, %v244
  %v283 = vadd.f32 %v42, %v247
  %v284 = vadd.f32 %v43, %v252
  %v285 = vadd.f32 %v44, %v255
  %v286 = vadd.f32 %v45, %v260
  %v287 = vadd.f32 %v46, %v263
  %v288 = vadd.f32 %v47, %v268
  %v289 = vadd.f32 %v48, %v271
  %vm290 = vcmask 523264
  %291 = vst.msk [vmem:[#allocation2] sm:$0xff] %vm290, %v274
  %292 = vst.msk [vmem:[#allocation2 + $0x8] sm:$0xff] %vm290, %v275
  %293 = vst.msk [vmem:[#allocation2 + $0x10] sm:$0xff] %vm290, %v276
  %294 = vst.msk [vmem:[#allocation2 + $0x18] sm:$0xff] %vm290, %v277
  %295 = vst.msk [vmem:[#allocation2 + $0x20] sm:$0xff] %vm290, %v278
  %296 = vst.msk [vmem:[#allocation2 + $0x28] sm:$0xff] %vm290, %v279
  %297 = vst.msk [vmem:[#allocation2 + $0x30] sm:$0xff] %vm290, %v280
  %298 = vst.msk [vmem:[#allocation2 + $0x38] sm:$0xff] %vm290, %v281
  %299 = vst.msk [vmem:[#allocation2 + $0x40] sm:$0xff] %vm290, %v282
  %300 = vst.msk [vmem:[#allocation2 + $0x48] sm:$0xff] %vm290, %v283
  %301 = vst.msk [vmem:[#allocation2 + $0x50] sm:$0xff] %vm290, %v284
  %302 = vst.msk [vmem:[#allocation2 + $0x58] sm:$0xff] %vm290, %v285
  %303 = vst.msk [vmem:[#allocation2 + $0x60] sm:$0xff] %vm290, %v286
  %304 = vst.msk [vmem:[#allocation2 + $0x68] sm:$0xff] %vm290, %v287
  %305 = vst.msk [vmem:[#allocation2 + $0x70] sm:$0xff] %vm290, %v288
  %306 = vst.msk [vmem:[#allocation2 + $0x78] sm:$0xff] %vm290, %v289
  // Predicated region
  $region14: #{efficient_self_attention.2} parent=0 // pred_check
    %p307 = pneg %p12
  $region15: #{efficient_self_attention.2} parent=0 // pred_check_branch
    %309 = sbr.rel (%p307) target = $region17
  $region16: #{efficient_self_attention.2} parent=0 // pred_region
    %v310 = vld [vmem:[#allocation2] sm:$0xff]
    %v311 = vld [vmem:[#allocation2 + $0x8] sm:$0xff]
    %v312 = vld [vmem:[#allocation2 + $0x10] sm:$0xff]
    %v313 = vld [vmem:[#allocation2 + $0x18] sm:$0xff]
    %v314 = vld [vmem:[#allocation2 + $0x20] sm:$0xff]
    %v315 = vld [vmem:[#allocation2 + $0x28] sm:$0xff]
    %v316 = vld [vmem:[#allocation2 + $0x30] sm:$0xff]
    %v317 = vld [vmem:[#allocation2 + $0x38] sm:$0xff]
    %v318 = vld [vmem:[#allocation2 + $0x40] sm:$0xff]
    %v319 = vld [vmem:[#allocation2 + $0x48] sm:$0xff]
    %v320 = vld [vmem:[#allocation2 + $0x50] sm:$0xff]
    %v321 = vld [vmem:[#allocation2 + $0x58] sm:$0xff]
    %v322 = vld [vmem:[#allocation2 + $0x60] sm:$0xff]
    %v323 = vld [vmem:[#allocation2 + $0x68] sm:$0xff]
    %v324 = vld [vmem:[#allocation2 + $0x70] sm:$0xff]
    %v325 = vld [vmem:[#allocation2 + $0x78] sm:$0xff]
    %v326 = vpack.c.bf16 %v311, %v310
    %v327 = vpack.c.bf16 %v313, %v312
    %v328 = vpack.c.bf16 %v315, %v314
    %v329 = vpack.c.bf16 %v317, %v316
    %v330 = vpack.c.bf16 %v319, %v318
    %v331 = vpack.c.bf16 %v321, %v320
    %v332 = vpack.c.bf16 %v323, %v322
    %v333 = vpack.c.bf16 %v325, %v324
    %v342 = vunpack.c.l.b16 %v326
    %v343 = vunpack.c.h.b16 %v326
    %v344 = vunpack.c.l.b16 %v327
    %v345 = vunpack.c.h.b16 %v327
    %v346 = vunpack.c.l.b16 %v328
    %v347 = vunpack.c.h.b16 %v328
    %v348 = vunpack.c.l.b16 %v329
    %v349 = vunpack.c.h.b16 %v329
    %v350 = vunpack.c.l.b16 %v330
    %v351 = vunpack.c.h.b16 %v330
    %v352 = vunpack.c.l.b16 %v331
    %v353 = vunpack.c.h.b16 %v331
    %v354 = vunpack.c.l.b16 %v332
    %v355 = vunpack.c.h.b16 %v332
    %v356 = vunpack.c.l.b16 %v333
    %v357 = vunpack.c.h.b16 %v333
    %v358 = vpack.c.b16 %v342, %v342
    %v359 = vpack.c.b16 %v343, %v343
    %v360 = vpack.c.b16 %v344, %v344
    %v361 = vpack.c.b16 %v345, %v345
    %v362 = vpack.c.b16 %v346, %v346
    %v363 = vpack.c.b16 %v347, %v347
    %v364 = vpack.c.b16 %v348, %v348
    %v365 = vpack.c.b16 %v349, %v349
    %v366 = vpack.c.b16 %v350, %v350
    %v367 = vpack.c.b16 %v351, %v351
    %v368 = vpack.c.b16 %v352, %v352
    %v369 = vpack.c.b16 %v353, %v353
    %v370 = vpack.c.b16 %v354, %v354
    %v371 = vpack.c.b16 %v355, %v355
    %v372 = vpack.c.b16 %v356, %v356
    %v373 = vpack.c.b16 %v357, %v357
    %vm390 = vcmask 519168
    %391 = vst.msk [vmem:[%s2] sm:$0xf] %vm390, %v358
    %392 = vst.msk [vmem:[%s2 + $0x4] sm:$0xf] %vm390, %v359
    %393 = vst.msk [vmem:[%s2 + $0x8] sm:$0xf] %vm390, %v360
    %394 = vst.msk [vmem:[%s2 + $0xc] sm:$0xf] %vm390, %v361
    %395 = vst.msk [vmem:[%s2 + $0x10] sm:$0xf] %vm390, %v362
    %396 = vst.msk [vmem:[%s2 + $0x14] sm:$0xf] %vm390, %v363
    %397 = vst.msk [vmem:[%s2 + $0x18] sm:$0xf] %vm390, %v364
    %398 = vst.msk [vmem:[%s2 + $0x1c] sm:$0xf] %vm390, %v365
    %399 = vst.msk [vmem:[%s2 + $0x20] sm:$0xf] %vm390, %v366
    %400 = vst.msk [vmem:[%s2 + $0x24] sm:$0xf] %vm390, %v367
    %401 = vst.msk [vmem:[%s2 + $0x28] sm:$0xf] %vm390, %v368
    %402 = vst.msk [vmem:[%s2 + $0x2c] sm:$0xf] %vm390, %v369
    %403 = vst.msk [vmem:[%s2 + $0x30] sm:$0xf] %vm390, %v370
    %404 = vst.msk [vmem:[%s2 + $0x34] sm:$0xf] %vm390, %v371
    %405 = vst.msk [vmem:[%s2 + $0x38] sm:$0xf] %vm390, %v372
    %406 = vst.msk [vmem:[%s2 + $0x3c] sm:$0xf] %vm390, %v373
  $region17: #{efficient_self_attention.2} parent=0 // pred_fallthru
    _
  // Predicated region
  $region18: #{efficient_self_attention.2} parent=0 // pred_check
    _
  $region19: #{efficient_self_attention.2} parent=0 // pred_check_branch
    %408 = sbr.rel (0) target = $region21
  $region20: #{efficient_self_attention.2} parent=0 // pred_region
    _
  $region21: #{efficient_self_attention.2} parent=0 // pred_fallthru
    _
  // Predicated region
  $region22: #{efficient_self_attention.2} parent=0 // pred_check
    _
  $region23: #{efficient_self_attention.2} parent=0 // pred_check_branch
    %410 = sbr.rel (0) target = $region25
  $region24: #{efficient_self_attention.2} parent=0 // pred_region
    _
  $region25: #{efficient_self_attention.2} parent=0 // pred_fallthru
    _

// kernel: efficient_self_attention.3
$region0: #{efficient_self_attention.3}
  #allocation0 [shape = 'u32[]', space=smem, size = 0x4, offset = 0x4, fixed_abs, tag = 'smem constant byte address 0x4 - core index']
  #allocation1 [shape = 'u32[144,128]{1,0:T(1,128)}', space=vmem, size = 0x12000, scoped, tag = 'internal scratch']
  #allocation2 [shape = 'f32[128,32]{1,0:T(8,128)}', space=vmem, size = 0x10000, scoped, tag = 'scratch operand']
  %s0 = inlined_call_operand.vmem [shape: bf16[2,256,32], index: 0, kind: input, shape index: {}]
  %s1 = inlined_call_operand.vmem [shape: bf16[4,32,8], index: 1, kind: input, shape index: {}]
  %s2 = inlined_call_operand.vmem [shape: bf16[2,4,8,128], index: 2, kind: input, shape index: {}]
  %s3 = inlined_call_operand.vmem [shape: bf16[2,4,128,8], index: 3, kind: input, shape index: {}]
  %s4 = inlined_call_operand.vmem [shape: bf16[4,8,32], index: 4, kind: input, shape index: {}]
  %s5 = inlined_call_operand.hbm [shape: f32[2,256,32], index: 5, kind: output, shape index: {}]
  %s6 = sld [smem:[#allocation0]]
  $region61: #{efficient_self_attention.3} parent=0
    _
  %s8 = ssub.s32 1, %s6
  %s9 = scalar_select 0, %s8, %s6
  $region1: #{efficient_self_attention.3} parent=0
    #allocation3 [shape = 'u8[131072]{0}', space=vmem, size = 0x20000, scoped, tag = 'output window, operand 0']
    #allocation4 [shape = 's32[2]{0}', space=sflag, size = 0x8, scoped, tag = 'scoped memory for efficient_self_attention.3']
    %10 = vsyncpa [#allocation4], 0
    %s11 = scalar_lea.sflag [#allocation4], 1
    %12 = vsyncpa %s11, 0
    loop: start=0, step=1, limit=18
    $region2: #{efficient_self_attention.3} parent=1 // loop_pre_header
      _
    $region3: #{efficient_self_attention.3} parent=1 // loop_header
      %s14 = sphi 0, %s18
      %p15 = scmp.ge.s32.totalorder %s14, 18
      %s21 = sphi 0, %s40
      %s22 = sphi 0, %s36
      %s23 = sphi 0, %s32
      %s24 = sphi 0, %s21
      %s25 = sphi 0, %s22
      %s26 = sphi 0, %s23
      %s27 = sphi 0, %s24
      %s28 = sphi 0, %s25
      %s29 = sphi 0, %s26
      %s45 = sphi 0, %s47
      %s48 = sphi 0, %s45
      %s49 = sphi 0, %s48
      %s65 = sphi 0, %s49
      %s71 = sphi 0, %s73
      %s74 = sphi 0, %s71
      %s75 = sphi 0, %s74
      %s91 = sphi 0, %s75
      %s99 = sphi 0, %s101
      %s102 = sphi 0, %s99
      %s103 = sphi 0, %s102
      %s119 = sphi 0, %s103
      %s127 = sphi 0, %s129
      %s130 = sphi 0, %s127
      %s131 = sphi 0, %s130
      %s147 = sphi 0, %s131
      %s153 = sphi 0, %s155
      %s156 = sphi 0, %s153
      %s157 = sphi 0, %s156
      %s173 = sphi 0, %s157
      %s181 = sphi 0, %s183
      %s184 = sphi 0, %s181
      %s185 = sphi 0, %s184
      %s201 = sphi 0, %s185
    $region4: #{efficient_self_attention.3} parent=1 // loop_header_branch
      %17 = sbr.rel (%p15) target = $region8
    $region5: #{efficient_self_attention.3} parent=1 // loop_body
      %s19 = ssub.s32 %s14, 1
      %s20 = ssub.s32 %s14, 2
      %s30 = sadd.s32 1, %s23
      %p31 = scmp.ge.s32.totalorder %s30, 4
      %s32 = scalar_select %p31, 0, %s30
      %s33 = sadd.s32 1, %s22
      %s34 = scalar_select %p31, %s33, %s22
      %p35 = scmp.ge.s32.totalorder %s34, 2
      %s36 = scalar_select %p35, 0, %s34
      %s37 = sadd.s32 1, %s21
      %s38 = scalar_select %p35, %s37, %s21
      %p39 = scmp.ge.s32.totalorder %s38, 2
      %s40 = scalar_select %p39, 0, %s38
      %s41 = ssub.s32 %s21, %s40
      %s42 = ssub.s32 %s22, %s36
      %s43 = sor.u32 %s41, %s42
      %p44 = scmp.eq.s32.totalorder %s43, 0
      %s46 = sadd.s32 %s45, 1
      %s47 = scalar_select %p44, %s45, %s46
      %p50 = pneg %p44
      %p51 = scmp.eq.s32.totalorder %s14, 15
      %p52 = por %p50, %p51
      %p53 = scmp.ne.s32.totalorder %s45, %s48
      %p54 = scmp.eq.s32.totalorder %s14, 0
      %p55 = por %p53, %p54
      %p56 = scmp.ne.s32.totalorder %s45, %s48
      %p57 = scmp.eq.s32.totalorder %s19, 15
      %p58 = por %p56, %p57
      %p59 = scmp.ne.s32.totalorder %s48, %s49
      %p60 = scmp.eq.s32.totalorder %s19, 0
      %p61 = por %p59, %p60
      %p62 = scmp.ne.s32.totalorder %s48, %s49
      %p63 = scmp.eq.s32.totalorder %s20, 15
      %p64 = por %p62, %p63
      %p66 = scmp.ne.s32.totalorder %s49, %s65
      %p67 = scmp.eq.s32.totalorder %s20, 0
      %p68 = por %p66, %p67
      %s69 = ssub.s32 %s23, %s32
      %p70 = scmp.eq.s32.totalorder %s69, 0
      %s72 = sadd.s32 %s71, 1
      %s73 = scalar_select %p70, %s71, %s72
      %p76 = pneg %p70
      %p77 = scmp.eq.s32.totalorder %s14, 15
      %p78 = por %p76, %p77
      %p79 = scmp.ne.s32.totalorder %s71, %s74
      %p80 = scmp.eq.s32.totalorder %s14, 0
      %p81 = por %p79, %p80
      %p82 = scmp.ne.s32.totalorder %s71, %s74
      %p83 = scmp.eq.s32.totalorder %s19, 15
      %p84 = por %p82, %p83
      %p85 = scmp.ne.s32.totalorder %s74, %s75
      %p86 = scmp.eq.s32.totalorder %s19, 0
      %p87 = por %p85, %p86
      %p88 = scmp.ne.s32.totalorder %s74, %s75
      %p89 = scmp.eq.s32.totalorder %s20, 15
      %p90 = por %p88, %p89
      %p92 = scmp.ne.s32.totalorder %s75, %s91
      %p93 = scmp.eq.s32.totalorder %s20, 0
      %p94 = por %p92, %p93
      %s95 = ssub.s32 %s21, %s40
      %s96 = ssub.s32 %s23, %s32
      %s97 = sor.u32 %s95, %s96
      %p98 = scmp.eq.s32.totalorder %s97, 0
      %s100 = sadd.s32 %s99, 1
      %s101 = scalar_select %p98, %s99, %s100
      %p104 = pneg %p98
      %p105 = scmp.eq.s32.totalorder %s14, 15
      %p106 = por %p104, %p105
      %p107 = scmp.ne.s32.totalorder %s99, %s102
      %p108 = scmp.eq.s32.totalorder %s14, 0
      %p109 = por %p107, %p108
      %p110 = scmp.ne.s32.totalorder %s99, %s102
      %p111 = scmp.eq.s32.totalorder %s19, 15
      %p112 = por %p110, %p111
      %p113 = scmp.ne.s32.totalorder %s102, %s103
      %p114 = scmp.eq.s32.totalorder %s19, 0
      %p115 = por %p113, %p114
      %p116 = scmp.ne.s32.totalorder %s102, %s103
      %p117 = scmp.eq.s32.totalorder %s20, 15
      %p118 = por %p116, %p117
      %p120 = scmp.ne.s32.totalorder %s103, %s119
      %p121 = scmp.eq.s32.totalorder %s20, 0
      %p122 = por %p120, %p121
      %s123 = ssub.s32 %s21, %s40
      %s124 = ssub.s32 %s23, %s32
      %s125 = sor.u32 %s123, %s124
      %p126 = scmp.eq.s32.totalorder %s125, 0
      %s128 = sadd.s32 %s127, 1
      %s129 = scalar_select %p126, %s127, %s128
      %p132 = pneg %p126
      %p133 = scmp.eq.s32.totalorder %s14, 15
      %p134 = por %p132, %p133
      %p135 = scmp.ne.s32.totalorder %s127, %s130
      %p136 = scmp.eq.s32.totalorder %s14, 0
      %p137 = por %p135, %p136
      %p138 = scmp.ne.s32.totalorder %s127, %s130
      %p139 = scmp.eq.s32.totalorder %s19, 15
      %p140 = por %p138, %p139
      %p141 = scmp.ne.s32.totalorder %s130, %s131
      %p142 = scmp.eq.s32.totalorder %s19, 0
      %p143 = por %p141, %p142
      %p144 = scmp.ne.s32.totalorder %s130, %s131
      %p145 = scmp.eq.s32.totalorder %s20, 15
      %p146 = por %p144, %p145
      %p148 = scmp.ne.s32.totalorder %s131, %s147
      %p149 = scmp.eq.s32.totalorder %s20, 0
      %p150 = por %p148, %p149
      %s151 = ssub.s32 %s23, %s32
      %p152 = scmp.eq.s32.totalorder %s151, 0
      %s154 = sadd.s32 %s153, 1
      %s155 = scalar_select %p152, %s153, %s154
      %p158 = pneg %p152
      %p159 = scmp.eq.s32.totalorder %s14, 15
      %p160 = por %p158, %p159
      %p161 = scmp.ne.s32.totalorder %s153, %s156
      %p162 = scmp.eq.s32.totalorder %s14, 0
      %p163 = por %p161, %p162
      %p164 = scmp.ne.s32.totalorder %s153, %s156
      %p165 = scmp.eq.s32.totalorder %s19, 15
      %p166 = por %p164, %p165
      %p167 = scmp.ne.s32.totalorder %s156, %s157
      %p168 = scmp.eq.s32.totalorder %s19, 0
      %p169 = por %p167, %p168
      %p170 = scmp.ne.s32.totalorder %s156, %s157
      %p171 = scmp.eq.s32.totalorder %s20, 15
      %p172 = por %p170, %p171
      %p174 = scmp.ne.s32.totalorder %s157, %s173
      %p175 = scmp.eq.s32.totalorder %s20, 0
      %p176 = por %p174, %p175
      %s177 = ssub.s32 %s21, %s40
      %s178 = ssub.s32 %s22, %s36
      %s179 = sor.u32 %s177, %s178
      %p180 = scmp.eq.s32.totalorder %s179, 0
      %s182 = sadd.s32 %s181, 1
      %s183 = scalar_select %p180, %s181, %s182
      %p186 = pneg %p180
      %p187 = scmp.eq.s32.totalorder %s14, 15
      %p188 = por %p186, %p187
      %p189 = scmp.ne.s32.totalorder %s181, %s184
      %p190 = scmp.eq.s32.totalorder %s14, 0
      %p191 = por %p189, %p190
      %p192 = scmp.ne.s32.totalorder %s181, %s184
      %p193 = scmp.eq.s32.totalorder %s19, 15
      %p194 = por %p192, %p193
      %p195 = scmp.ne.s32.totalorder %s184, %s185
      %p196 = scmp.eq.s32.totalorder %s19, 0
      %p197 = por %p195, %p196
      %p198 = scmp.ne.s32.totalorder %s184, %s185
      %p199 = scmp.eq.s32.totalorder %s20, 15
      %p200 = por %p198, %p199
      %p202 = scmp.ne.s32.totalorder %s185, %s201
      %p203 = scmp.eq.s32.totalorder %s20, 0
      %p204 = por %p202, %p203
      %p205 = scmp.le.s32.totalorder 1, %s14
      %p206 = scmp.lt.s32.totalorder %s14, 17
      %p207 = pnand %p205, %p206
      %p208 = pneg %p207
      // Predicated region
      $region9: #{efficient_self_attention.3} parent=5 // pred_check
        _
      $region10: #{efficient_self_attention.3} parent=5 // pred_check_branch
        %210 = sbr.rel (%p207) target = $region12
      $region11: #{efficient_self_attention.3} parent=5 // pred_region
        %s211 = ssub.s32 %s14, 1
      $region12: #{efficient_self_attention.3} parent=5 // pred_fallthru
        _
      %p212 = scmp.lt.s32.totalorder %s14, 16
      // Predicated region
      $region13: #{efficient_self_attention.3} parent=5 // pred_check
        %p213 = pneg %p212
      $region14: #{efficient_self_attention.3} parent=5 // pred_check_branch
        %215 = sbr.rel (%p213) target = $region16
      $region15: #{efficient_self_attention.3} parent=5 // pred_region
        // Predicated region
        $region17: #{efficient_self_attention.3} parent=15 // pred_check
          %p216 = pneg %p55
        $region18: #{efficient_self_attention.3} parent=15 // pred_check_branch
          %218 = sbr.rel (%p216) target = $region20
        $region19: #{efficient_self_attention.3} parent=15 // pred_region
          %s219 = smul.u32 16, %s22
          %p220 = scmp.lt.s32.totalorder %s21, 1
          %s221 = scalar_select %p220, %s21, 1
          %p222 = scmp.lt.s32.totalorder %s219, 31
          %s223 = scalar_select %p222, %s219, 31
          %s224 = smul.addr %s221, 32
          %s225 = sadd.s32 %s223, %s224
          %s226 = smul.addr %s225, 4
          %s227 = scalar_lea.vmem %s0, %s226
          %s228 = smul.u32 16, %s22
        $region20: #{efficient_self_attention.3} parent=15 // pred_fallthru
          _
        // Predicated region
        $region21: #{efficient_self_attention.3} parent=15 // pred_check
          %p229 = pneg %p81
        $region22: #{efficient_self_attention.3} parent=15 // pred_check_branch
          %231 = sbr.rel (%p229) target = $region24
        $region23: #{efficient_self_attention.3} parent=15 // pred_region
          %p232 = scmp.lt.s32.totalorder %s23, 3
          %s233 = scalar_select %p232, %s23, 3
          %s234 = smul.addr %s233, 4
          %s235 = smul.addr %s234, 4
          %s236 = scalar_lea.vmem %s1, %s235
        $region24: #{efficient_self_attention.3} parent=15 // pred_fallthru
          _
        // Predicated region
        $region25: #{efficient_self_attention.3} parent=15 // pred_check
          %p237 = pneg %p109
        $region26: #{efficient_self_attention.3} parent=15 // pred_check_branch
          %239 = sbr.rel (%p237) target = $region28
        $region27: #{efficient_self_attention.3} parent=15 // pred_region
          %p240 = scmp.lt.s32.totalorder %s21, 1
          %s241 = scalar_select %p240, %s21, 1
          %p242 = scmp.lt.s32.totalorder %s23, 3
          %s243 = scalar_select %p242, %s23, 3
          %s244 = smul.addr %s241, 4
          %s245 = sadd.s32 %s243, %s244
          %s246 = smul.addr %s245, 4
          %s247 = scalar_lea.vmem %s2, %s246
        $region28: #{efficient_self_attention.3} parent=15 // pred_fallthru
          _
        // Predicated region
        $region29: #{efficient_self_attention.3} parent=15 // pred_check
          %p248 = pneg %p137
        $region30: #{efficient_self_attention.3} parent=15 // pred_check_branch
          %250 = sbr.rel (%p248) target = $region32
        $region31: #{efficient_self_attention.3} parent=15 // pred_region
          %p251 = scmp.lt.s32.totalorder %s21, 1
          %s252 = scalar_select %p251, %s21, 1
          %p253 = scmp.lt.s32.totalorder %s23, 3
          %s254 = scalar_select %p253, %s23, 3
          %s255 = smul.addr %s254, 16
          %s256 = smul.addr %s252, 64
          %s257 = sadd.s32 %s255, %s256
          %s258 = smul.addr %s257, 4
          %s259 = scalar_lea.vmem %s3, %s258
        $region32: #{efficient_self_attention.3} parent=15 // pred_fallthru
          _
        // Predicated region
        $region33: #{efficient_self_attention.3} parent=15 // pred_check
          %p260 = pneg %p163
        $region34: #{efficient_self_attention.3} parent=15 // pred_check_branch
          %262 = sbr.rel (%p260) target = $region36
        $region35: #{efficient_self_attention.3} parent=15 // pred_region
          %p263 = scmp.lt.s32.totalorder %s23, 3
          %s264 = scalar_select %p263, %s23, 3
          %s265 = smul.addr %s264, 4
          %s266 = scalar_lea.vmem %s4, %s265
        $region36: #{efficient_self_attention.3} parent=15 // pred_fallthru
          _
      $region16: #{efficient_self_attention.3} parent=5 // pred_fallthru
        _
      %p267 = scmp.le.s32.totalorder 1, %s14
      %p268 = scmp.lt.s32.totalorder %s14, 17
      %p269 = pnand %p267, %p268
      %p270 = pneg %p269
      // Predicated region
      $region37: #{efficient_self_attention.3} parent=5 // pred_check
        _
      $region38: #{efficient_self_attention.3} parent=5 // pred_check_branch
        %272 = sbr.rel (%p269) target = $region40
      $region39: #{efficient_self_attention.3} parent=5 // pred_region
        %s273 = ssub.s32 %s14, 1
        %s274 = smul.u32 16, %s25
        %p275 = scmp.lt.s32.totalorder %s24, 1
        %s276 = scalar_select %p275, %s24, 1
        %p277 = scmp.lt.s32.totalorder %s274, 31
        %s278 = scalar_select %p277, %s274, 31
        %s279 = smul.addr %s276, 32
        %s280 = sadd.s32 %s278, %s279
        %s281 = smul.addr %s280, 4
        %s282 = scalar_lea.vmem %s0, %s281
        %p283 = pneg %p61
        %p284 = pneg %p58
        %p285 = scmp.lt.s32.totalorder %s26, 3
        %s286 = scalar_select %p285, %s26, 3
        %s287 = smul.addr %s286, 4
        %s288 = smul.addr %s287, 4
        %s289 = scalar_lea.vmem %s1, %s288
        %p290 = pneg %p87
        %p291 = pneg %p84
        %p292 = scmp.lt.s32.totalorder %s24, 1
        %s293 = scalar_select %p292, %s24, 1
        %p294 = scmp.lt.s32.totalorder %s26, 3
        %s295 = scalar_select %p294, %s26, 3
        %s296 = smul.addr %s293, 4
        %s297 = sadd.s32 %s295, %s296
        %s298 = smul.addr %s297, 4
        %s299 = scalar_lea.vmem %s2, %s298
        %p300 = pneg %p115
        %p301 = pneg %p112
        %p302 = scmp.lt.s32.totalorder %s24, 1
        %s303 = scalar_select %p302, %s24, 1
        %p304 = scmp.lt.s32.totalorder %s26, 3
        %s305 = scalar_select %p304, %s26, 3
        %s306 = smul.addr %s305, 16
        %s307 = smul.addr %s303, 64
        %s308 = sadd.s32 %s306, %s307
        %s309 = smul.addr %s308, 4
        %s310 = scalar_lea.vmem %s3, %s309
        %p311 = pneg %p143
        %p312 = pneg %p140
        %p313 = scmp.lt.s32.totalorder %s26, 3
        %s314 = scalar_select %p313, %s26, 3
        %s315 = smul.addr %s314, 4
        %s316 = scalar_lea.vmem %s4, %s315
        %p317 = pneg %p169
        %p318 = pneg %p166
        %p319 = pneg %p197
        %p320 = pneg %p194
        %s321 = sand.u32 %s184, 1
        %s322 = scalar_lea.sflag [#allocation4], %s321
        %s323 = sand.u32 %s184, 1
        %s324 = smul.addr %s323, 128
        %s325 = scalar_lea.vmem [#allocation3], %s324
        %s326 = smul.u32 16, %s25
        %p327 = scmp.lt.s32.totalorder %s24, 1
        %s328 = scalar_select %p327, %s24, 1
        %p329 = scmp.lt.s32.totalorder %s326, 31
        %s330 = scalar_select %p329, %s326, 31
        %s331 = smul.addr %s328, 32
        %s332 = sadd.s32 %s330, %s331
        %s333 = smul.addr %s332, 4
        %s334 = scalar_lea.vmem %s0, %s333
        %s335 = smul.u32 16, %s25
        %p336 = scmp.lt.s32.totalorder %s26, 3
        %s337 = scalar_select %p336, %s26, 3
        %s338 = smul.addr %s337, 4
        %s339 = smul.addr %s338, 4
        %s340 = scalar_lea.vmem %s1, %s339
        %p341 = scmp.lt.s32.totalorder %s24, 1
        %s342 = scalar_select %p341, %s24, 1
        %p343 = scmp.lt.s32.totalorder %s26, 3
        %s344 = scalar_select %p343, %s26, 3
        %s345 = smul.addr %s342, 4
        %s346 = sadd.s32 %s344, %s345
        %s347 = smul.addr %s346, 4
        %s348 = scalar_lea.vmem %s2, %s347
        %p349 = scmp.lt.s32.totalorder %s24, 1
        %s350 = scalar_select %p349, %s24, 1
        %p351 = scmp.lt.s32.totalorder %s26, 3
        %s352 = scalar_select %p351, %s26, 3
        %s353 = smul.addr %s352, 16
        %s354 = smul.addr %s350, 64
        %s355 = sadd.s32 %s353, %s354
        %s356 = smul.addr %s355, 4
        %s357 = scalar_lea.vmem %s3, %s356
        %p358 = scmp.lt.s32.totalorder %s26, 3
        %s359 = scalar_select %p358, %s26, 3
        %s360 = smul.addr %s359, 4
        %s361 = scalar_lea.vmem %s4, %s360
        %s362 = smul.u32 16, %s25
        %p364 = scmp.eq.s32.totalorder %s26, 0
        // Predicated region
        $region41: #{efficient_self_attention.3} parent=39 // pred_check
          %p365 = pneg %p364
        $region42: #{efficient_self_attention.3} parent=39 // pred_check_branch
          %367 = sbr.rel (%p365) target = $region44
        $region43: #{efficient_self_attention.3} parent=39 // pred_region
          %vm368 = vcmask 261120
          %369 = vst.msk [vmem:[#allocation2] sm:$0xff] %vm368, 0.0
          %370 = vst.msk [vmem:[#allocation2 + $0x8] sm:$0xff] %vm368, 0.0
          %371 = vst.msk [vmem:[#allocation2 + $0x10] sm:$0xff] %vm368, 0.0
          %372 = vst.msk [vmem:[#allocation2 + $0x18] sm:$0xff] %vm368, 0.0
          %373 = vst.msk [vmem:[#allocation2 + $0x20] sm:$0xff] %vm368, 0.0
          %374 = vst.msk [vmem:[#allocation2 + $0x28] sm:$0xff] %vm368, 0.0
          %375 = vst.msk [vmem:[#allocation2 + $0x30] sm:$0xff] %vm368, 0.0
          %376 = vst.msk [vmem:[#allocation2 + $0x38] sm:$0xff] %vm368, 0.0
          %377 = vst.msk [vmem:[#allocation2 + $0x40] sm:$0xff] %vm368, 0.0
          %378 = vst.msk [vmem:[#allocation2 + $0x48] sm:$0xff] %vm368, 0.0
          %379 = vst.msk [vmem:[#allocation2 + $0x50] sm:$0xff] %vm368, 0.0
          %380 = vst.msk [vmem:[#allocation2 + $0x58] sm:$0xff] %vm368, 0.0
          %381 = vst.msk [vmem:[#allocation2 + $0x60] sm:$0xff] %vm368, 0.0
          %382 = vst.msk [vmem:[#allocation2 + $0x68] sm:$0xff] %vm368, 0.0
          %383 = vst.msk [vmem:[#allocation2 + $0x70] sm:$0xff] %vm368, 0.0
          %384 = vst.msk [vmem:[#allocation2 + $0x78] sm:$0xff] %vm368, 0.0
        $region44: #{efficient_self_attention.3} parent=39 // pred_fallthru
          _
        %v385 = vld [vmem:[%s334] sm:$0xf]
        %v386 = vld [vmem:[%s334 + $0x4] sm:$0xf]
        %v387 = vld [vmem:[%s334 + $0x8] sm:$0xf]
        %v388 = vld [vmem:[%s334 + $0xc] sm:$0xf]
        %v389 = vld [vmem:[%s334 + $0x10] sm:$0xf]
        %v390 = vld [vmem:[%s334 + $0x14] sm:$0xf]
        %v391 = vld [vmem:[%s334 + $0x18] sm:$0xf]
        %v392 = vld [vmem:[%s334 + $0x1c] sm:$0xf]
        %v393 = vld [vmem:[%s334 + $0x20] sm:$0xf]
        %v394 = vld [vmem:[%s334 + $0x24] sm:$0xf]
        %v395 = vld [vmem:[%s334 + $0x28] sm:$0xf]
        %v396 = vld [vmem:[%s334 + $0x2c] sm:$0xf]
        %v397 = vld [vmem:[%s334 + $0x30] sm:$0xf]
        %v398 = vld [vmem:[%s334 + $0x34] sm:$0xf]
        %v399 = vld [vmem:[%s334 + $0x38] sm:$0xf]
        %v400 = vld [vmem:[%s334 + $0x3c] sm:$0xf]
        %v401 = vld [vmem:[%s340] sm:$0xf]
        %v402 = vld [vmem:[%s340 + $0x4] sm:$0xf]
        %v403 = vld [vmem:[%s340 + $0x8] sm:$0xf]
        %v404 = vld [vmem:[%s340 + $0xc] sm:$0xf]
        %v421 = vunpack.c.l.b16 %v385
        %v422 = vunpack.c.l.b16 %v386
        %v423 = vunpack.c.l.b16 %v387
        %v424 = vunpack.c.l.b16 %v388
        %v425 = vunpack.c.l.b16 %v389
        %v426 = vunpack.c.l.b16 %v390
        %v427 = vunpack.c.l.b16 %v391
        %v428 = vunpack.c.l.b16 %v392
        %v429 = vunpack.c.l.b16 %v393
        %v430 = vunpack.c.l.b16 %v394
        %v431 = vunpack.c.l.b16 %v395
        %v432 = vunpack.c.l.b16 %v396
        %v433 = vunpack.c.l.b16 %v397
        %v434 = vunpack.c.l.b16 %v398
        %v435 = vunpack.c.l.b16 %v399
        %v436 = vunpack.c.l.b16 %v400
        %v437 = vpack.c.b16 %v422, %v421
        %v438 = vpack.c.b16 %v424, %v423
        %v439 = vpack.c.b16 %v426, %v425
        %v440 = vpack.c.b16 %v428, %v427
        %v441 = vpack.c.b16 %v430, %v429
        %v442 = vpack.c.b16 %v432, %v431
        %v443 = vpack.c.b16 %v434, %v433
        %v444 = vpack.c.b16 %v436, %v435
        %v449 = vunpack.c.l.b16 %v401
        %v450 = vunpack.c.l.b16 %v402
        %v451 = vunpack.c.l.b16 %v403
        %v452 = vunpack.c.l.b16 %v404
        %v453 = vpack.c.b16 %v450, %v449
        %v454 = vpack.c.b16 %v452, %v451
        %vm457 = vcmask 261120
        %v459 = vsel %vm457, %v437, 0
        %v462 = vsel %vm457, %v438, 0
        %v465 = vsel %vm457, %v439, 0
        %v468 = vsel %vm457, %v440, 0
        %v471 = vsel %vm457, %v441, 0
        %v474 = vsel %vm457, %v442, 0
        %v477 = vsel %vm457, %v443, 0
        %v480 = vsel %vm457, %v444, 0
        %482 = vmatprep.subr.bf16.mxu0 0
        %483 = vmatpush1.bf16.msra.mxu0 %v453
        %484 = vmatprep.subr.bf16.mxu0 0
        %485 = vmatpush1.bf16.msra.mxu0 %v454
        %486 = vmatprep.subr.bf16.mxu0 0
        %487 = vmatpush1.bf16.msra.mxu0 0
        %488 = vmatprep.subr.bf16.mxu0 0
        %489 = vmatpush1.bf16.msra.mxu0 0
        %490 = vmatprep.subr.bf16.mxu0 0
        %491 = vmatpush1.bf16.msra.mxu0 0
        %492 = vmatprep.subr.bf16.mxu0 0
        %493 = vmatpush1.bf16.msra.mxu0 0
        %494 = vmatprep.subr.bf16.mxu0 0
        %495 = vmatpush1.bf16.msra.mxu0 0
        %496 = vmatprep.subr.bf16.mxu0 0
        %497 = vmatpush1.bf16.msra.mxu0 0
        %498 = vmatprep.subr.bf16.mxu0 0
        %499 = vmatpush1.bf16.msra.mxu0 0
        %500 = vmatprep.subr.bf16.mxu0 0
        %501 = vmatpush1.bf16.msra.mxu0 0
        %502 = vmatprep.subr.bf16.mxu0 0
        %503 = vmatpush1.bf16.msra.mxu0 0
        %504 = vmatprep.subr.bf16.mxu0 0
        %505 = vmatpush1.bf16.msra.mxu0 0
        %506 = vmatprep.subr.bf16.mxu0 0
        %507 = vmatpush1.bf16.msra.mxu0 0
        %508 = vmatprep.subr.bf16.mxu0 0
        %509 = vmatpush1.bf16.msra.mxu0 0
        %510 = vmatprep.subr.bf16.mxu0 0
        %511 = vmatpush1.bf16.msra.mxu0 0
        %512 = vmatprep.subr.bf16.mxu0 0
        %513 = vmatpush1.bf16.msra.mxu0 0
        %514 = vmatprep.mubr.bf16.mxu0 0
        %515 = vmatmul.mubr.bf16.gmra.mrb[0].mxu0 %v459
        %v516 = vpop.f32.mrb[0].mxu0
        %v517 = vadd.f32 0.0, %v516
        %v518 = vpop.f32.mrb[0].mxu0
        %v519 = vpop.f32.mrb[0].mxu0
        %v520 = vadd.f32 0.0, %v519
        %v521 = vpop.f32.mrb[0].mxu0
        %522 = vmatprep.mubr.bf16.mxu0 0
        %523 = vmatmul.mubr.bf16.gmra.mrb[0].mxu0 %v462
        %v524 = vpop.f32.mrb[0].mxu0
        %v525 = vadd.f32 0.0, %v524
        %v526 = vpop.f32.mrb[0].mxu0
        %v527 = vpop.f32.mrb[0].mxu0
        %v528 = vadd.f32 0.0, %v527
        %v529 = vpop.f32.mrb[0].mxu0
        %530 = vmatprep.mubr.bf16.mxu0 0
        %531 = vmatmul.mubr.bf16.gmra.mrb[0].mxu0 %v465
        %v532 = vpop.f32.mrb[0].mxu0
        %v533 = vadd.f32 0.0, %v532
        %v534 = vpop.f32.mrb[0].mxu0
        %v535 = vpop.f32.mrb[0].mxu0
        %v536 = vadd.f32 0.0, %v535
        %v537 = vpop.f32.mrb[0].mxu0
        %538 = vmatprep.mubr.bf16.mxu0 0
        %539 = vmatmul.mubr.bf16.gmra.mrb[0].mxu0 %v468
        %v540 = vpop.f32.mrb[0].mxu0
        %v541 = vadd.f32 0.0, %v540
        %v542 = vpop.f32.mrb[0].mxu0
        %v543 = vpop.f32.mrb[0].mxu0
        %v544 = vadd.f32 0.0, %v543
        %v545 = vpop.f32.mrb[0].mxu0
        %546 = vmatprep.mubr.bf16.mxu0 0
        %547 = vmatmul.mubr.bf16.gmra.mrb[0].mxu0 %v471
        %v548 = vpop.f32.mrb[0].mxu0
        %v549 = vadd.f32 0.0, %v548
        %v550 = vpop.f32.mrb[0].mxu0
        %v551 = vpop.f32.mrb[0].mxu0
        %v552 = vadd.f32 0.0, %v551
        %v553 = vpop.f32.mrb[0].mxu0
        %554 = vmatprep.mubr.bf16.mxu0 0
        %555 = vmatmul.mubr.bf16.gmra.mrb[0].mxu0 %v474
        %v556 = vpop.f32.mrb[0].mxu0
        %v557 = vadd.f32 0.0, %v556
        %v558 = vpop.f32.mrb[0].mxu0
        %v559 = vpop.f32.mrb[0].mxu0
        %v560 = vadd.f32 0.0, %v559
        %v561 = vpop.f32.mrb[0].mxu0
        %562 = vmatprep.mubr.bf16.mxu0 0
        %563 = vmatmul.mubr.bf16.gmra.mrb[0].mxu0 %v477
        %v564 = vpop.f32.mrb[0].mxu0
        %v565 = vadd.f32 0.0, %v564
        %v566 = vpop.f32.mrb[0].mxu0
        %v567 = vpop.f32.mrb[0].mxu0
        %v568 = vadd.f32 0.0, %v567
        %v569 = vpop.f32.mrb[0].mxu0
        %570 = vmatprep.mubr.bf16.mxu0 0
        %571 = vmatmul.mubr.bf16.gmra.mrb[0].mxu0 %v480
        %v572 = vpop.f32.mrb[0].mxu0
        %v573 = vadd.f32 0.0, %v572
        %v574 = vpop.f32.mrb[0].mxu0
        %v575 = vpop.f32.mrb[0].mxu0
        %v576 = vadd.f32 0.0, %v575
        %v577 = vpop.f32.mrb[0].mxu0
        %578 = vdwg.mxu0
        %v579 = vpack.c.bf16 %v520, %v517
        %v580 = vpack.c.bf16 %v528, %v525
        %v581 = vpack.c.bf16 %v536, %v533
        %v582 = vpack.c.bf16 %v544, %v541
        %v583 = vpack.c.bf16 %v552, %v549
        %v584 = vpack.c.bf16 %v560, %v557
        %v585 = vpack.c.bf16 %v568, %v565
        %v586 = vpack.c.bf16 %v576, %v573
        %v587 = vld [vmem:[%s348] sm:$0xf]
        %vm588 = vcmask 64512
        %v590 = vsel %vm588, %v579, 0
        %v593 = vsel %vm588, %v580, 0
        %v596 = vsel %vm588, %v581, 0
        %v599 = vsel %vm588, %v582, 0
        %v602 = vsel %vm588, %v583, 0
        %v605 = vsel %vm588, %v584, 0
        %v608 = vsel %vm588, %v585, 0
        %v611 = vsel %vm588, %v586, 0
        %vm613 = vcmask 1043456
        %v615 = vsel %vm613, %v587, 0
        %617 = vmatprep.subr.bf16.mxu0 0
        %618 = vmatpush1.bf16.msra.mxu0 %v615
        %619 = vmatprep.subr.bf16.mxu0 0
        %620 = vmatpush1.bf16.msra.mxu0 0
        %621 = vmatprep.subr.bf16.mxu0 0
        %622 = vmatpush1.bf16.msra.mxu0 0
        %623 = vmatprep.subr.bf16.mxu0 0
        %624 = vmatpush1.bf16.msra.mxu0 0
        %625 = vmatprep.subr.bf16.mxu0 0
        %626 = vmatpush1.bf16.msra.mxu0 0
        %627 = vmatprep.subr.bf16.mxu0 0
        %628 = vmatpush1.bf16.msra.mxu0 0
        %629 = vmatprep.subr.bf16.mxu0 0
        %630 = vmatpush1.bf16.msra.mxu0 0
        %631 = vmatprep.subr.bf16.mxu0 0
        %632 = vmatpush1.bf16.msra.mxu0 0
        %633 = vmatprep.subr.bf16.mxu0 0
        %634 = vmatpush1.bf16.msra.mxu0 0
        %635 = vmatprep.subr.bf16.mxu0 0
        %636 = vmatpush1.bf16.msra.mxu0 0
        %637 = vmatprep.subr.bf16.mxu0 0
        %638 = vmatpush1.bf16.msra.mxu0 0
        %639 = vmatprep.subr.bf16.mxu0 0
        %640 = vmatpush1.bf16.msra.mxu0 0
        %641 = vmatprep.subr.bf16.mxu0 0
        %642 = vmatpush1.bf16.msra.mxu0 0
        %643 = vmatprep.subr.bf16.mxu0 0
        %644 = vmatpush1.bf16.msra.mxu0 0
        %645 = vmatprep.subr.bf16.mxu0 0
        %646 = vmatpush1.bf16.msra.mxu0 0
        %647 = vmatprep.subr.bf16.mxu0 0
        %648 = vmatpush1.bf16.msra.mxu0 0
        %649 = vmatprep.mubr.bf16.mxu0 0
        %650 = vmatmul.mubr.bf16.gmra.mrb[0].mxu0 %v590
        %v651 = vpop.f32.mrb[0].mxu0
        %v652 = vadd.f32 0.0, %v651
        %v653 = vpop.f32.mrb[0].mxu0
        %v654 = vpop.f32.mrb[0].mxu0
        %v655 = vadd.f32 0.0, %v654
        %v656 = vpop.f32.mrb[0].mxu0
        %657 = vmatprep.mubr.bf16.mxu0 0
        %658 = vmatmul.mubr.bf16.gmra.mrb[0].mxu0 %v593
        %v659 = vpop.f32.mrb[0].mxu0
        %v660 = vadd.f32 0.0, %v659
        %v661 = vpop.f32.mrb[0].mxu0
        %v662 = vpop.f32.mrb[0].mxu0
        %v663 = vadd.f32 0.0, %v662
        %v664 = vpop.f32.mrb[0].mxu0
        %665 = vmatprep.mubr.bf16.mxu0 0
        %666 = vmatmul.mubr.bf16.gmra.mrb[0].mxu0 %v596
        %v667 = vpop.f32.mrb[0].mxu0
        %v668 = vadd.f32 0.0, %v667
        %v669 = vpop.f32.mrb[0].mxu0
        %v670 = vpop.f32.mrb[0].mxu0
        %v671 = vadd.f32 0.0, %v670
        %v672 = vpop.f32.mrb[0].mxu0
        %673 = vmatprep.mubr.bf16.mxu0 0
        %674 = vmatmul.mubr.bf16.gmra.mrb[0].mxu0 %v599
        %v675 = vpop.f32.mrb[0].mxu0
        %v676 = vadd.f32 0.0, %v675
        %v677 = vpop.f32.mrb[0].mxu0
        %v678 = vpop.f32.mrb[0].mxu0
        %v679 = vadd.f32 0.0, %v678
        %v680 = vpop.f32.mrb[0].mxu0
        %681 = vmatprep.mubr.bf16.mxu0 0
        %682 = vmatmul.mubr.bf16.gmra.mrb[0].mxu0 %v602
        %v683 = vpop.f32.mrb[0].mxu0
        %v684 = vadd.f32 0.0, %v683
        %v685 = vpop.f32.mrb[0].mxu0
        %v686 = vpop.f32.mrb[0].mxu0
        %v687 = vadd.f32 0.0, %v686
        %v688 = vpop.f32.mrb[0].mxu0
        %689 = vmatprep.mubr.bf16.mxu0 0
        %690 = vmatmul.mubr.bf16.gmra.mrb[0].mxu0 %v605
        %v691 = vpop.f32.mrb[0].mxu0
        %v692 = vadd.f32 0.0, %v691
        %v693 = vpop.f32.mrb[0].mxu0
        %v694 = vpop.f32.mrb[0].mxu0
        %v695 = vadd.f32 0.0, %v694
        %v696 = vpop.f32.mrb[0].mxu0
        %697 = vmatprep.mubr.bf16.mxu0 0
        %698 = vmatmul.mubr.bf16.gmra.mrb[0].mxu0 %v608
        %v699 = vpop.f32.mrb[0].mxu0
        %v700 = vadd.f32 0.0, %v699
        %v701 = vpop.f32.mrb[0].mxu0
        %v702 = vpop.f32.mrb[0].mxu0
        %v703 = vadd.f32 0.0, %v702
        %v704 = vpop.f32.mrb[0].mxu0
        %705 = vmatprep.mubr.bf16.mxu0 0
        %706 = vmatmul.mubr.bf16.gmra.mrb[0].mxu0 %v611
        %v707 = vpop.f32.mrb[0].mxu0
        %v708 = vadd.f32 0.0, %v707
        %v709 = vpop.f32.mrb[0].mxu0
        %v710 = vpop.f32.mrb[0].mxu0
        %v711 = vadd.f32 0.0, %v710
        %v712 = vpop.f32.mrb[0].mxu0
        %713 = vdwg.mxu0
        %v714 = vlaneseq
        %v715 = vand.u32 %v714, 127
        %vm716 = vcmp.lt.s32.totalorder %v715, 64
        %v717 = vsel %vm716, %v652, -1e+30
        %v718 = vsel %vm716, %v655, -1e+30
        %v719 = vsel %vm716, %v660, -1e+30
        %v720 = vsel %vm716, %v663, -1e+30
        %v721 = vsel %vm716, %v668, -1e+30
        %v722 = vsel %vm716, %v671, -1e+30
        %v723 = vsel %vm716, %v676, -1e+30
        %v724 = vsel %vm716, %v679, -1e+30
        %v725 = vsel %vm716, %v684, -1e+30
        %v726 = vsel %vm716, %v687, -1e+30
        %v727 = vsel %vm716, %v692, -1e+30
        %v728 = vsel %vm716, %v695, -1e+30
        %v729 = vsel %vm716, %v700, -1e+30
        %v730 = vsel %vm716, %v703, -1e+30
        %v731 = vsel %vm716, %v708, -1e+30
        %v732 = vsel %vm716, %v711, -1e+30
        %733 = vmax.xlane.f32.xlu0 %v717
        %v734 = vpop.xlane.xlu0 %733
        %735 = vmax.xlane.f32.xlu0 %v718
        %v736 = vpop.xlane.xlu0 %735
        %737 = vmax.xlane.f32.xlu0 %v719
        %v738 = vpop.xlane.xlu0 %737
        %739 = vmax.xlane.f32.xlu0 %v720
        %v740 = vpop.xlane.xlu0 %739
        %741 = vmax.xlane.f32.xlu0 %v721
        %v742 = vpop.xlane.xlu0 %741
        %743 = vmax.xlane.f32.xlu0 %v722
        %v744 = vpop.xlane.xlu0 %743
        %745 = vmax.xlane.f32.xlu0 %v723
        %v746 = vpop.xlane.xlu0 %745
        %747 = vmax.xlane.f32.xlu0 %v724
        %v748 = vpop.xlane.xlu0 %747
        %749 = vmax.xlane.f32.xlu0 %v725
        %v750 = vpop.xlane.xlu0 %749
        %751 = vmax.xlane.f32.xlu0 %v726
        %v752 = vpop.xlane.xlu0 %751
        %753 = vmax.xlane.f32.xlu0 %v727
        %v754 = vpop.xlane.xlu0 %753
        %755 = vmax.xlane.f32.xlu0 %v728
        %v756 = vpop.xlane.xlu0 %755
        %757 = vmax.xlane.f32.xlu0 %v729
        %v758 = vpop.xlane.xlu0 %757
        %759 = vmax.xlane.f32.xlu0 %v730
        %v760 = vpop.xlane.xlu0 %759
        %761 = vmax.xlane.f32.xlu0 %v731
        %v762 = vpop.xlane.xlu0 %761
        %763 = vmax.xlane.f32.xlu0 %v732
        %v764 = vpop.xlane.xlu0 %763
        %v765 = vsub.f32 %v717, %v734
        %v766 = vsub.f32 %v718, %v736
        %v767 = vsub.f32 %v719, %v738
        %v768 = vsub.f32 %v720, %v740
        %v769 = vsub.f32 %v721, %v742
        %v770 = vsub.f32 %v722, %v744
        %v771 = vsub.f32 %v723, %v746
        %v772 = vsub.f32 %v724, %v748
        %v773 = vsub.f32 %v725, %v750
        %v774 = vsub.f32 %v726, %v752
        %v775 = vsub.f32 %v727, %v754
        %v776 = vsub.f32 %v728, %v756
        %v777 = vsub.f32 %v729, %v758
        %v778 = vsub.f32 %v730, %v760
        %v779 = vsub.f32 %v731, %v762
        %v780 = vsub.f32 %v732, %v764
        %v781 = vmul.f32 %v765, 1.442695
        %v782 = vpow.pop %v781
        %v783 = vmul.f32 %v766, 1.442695
        %v784 = vpow.pop %v783
        %v785 = vmul.f32 %v767, 1.442695
        %v786 = vpow.pop %v785
        %v787 = vmul.f32 %v768, 1.442695
        %v788 = vpow.pop %v787
        %v789 = vmul.f32 %v769, 1.442695
        %v790 = vpow.pop %v789
        %v791 = vmul.f32 %v770, 1.442695
        %v792 = vpow.pop %v791
        %v793 = vmul.f32 %v771, 1.442695
        %v794 = vpow.pop %v793
        %v795 = vmul.f32 %v772, 1.442695
        %v796 = vpow.pop %v795
        %v797 = vmul.f32 %v773, 1.442695
        %v798 = vpow.pop %v797
        %v799 = vmul.f32 %v774, 1.442695
        %v800 = vpow.pop %v799
        %v801 = vmul.f32 %v775, 1.442695
        %v802 = vpow.pop %v801
        %v803 = vmul.f32 %v776, 1.442695
        %v804 = vpow.pop %v803
        %v805 = vmul.f32 %v777, 1.442695
        %v806 = vpow.pop %v805
        %v807 = vmul.f32 %v778, 1.442695
        %v808 = vpow.pop %v807
        %v809 = vmul.f32 %v779, 1.442695
        %v810 = vpow.pop %v809
        %v811 = vmul.f32 %v780, 1.442695
        %v812 = vpow.pop %v811
        %813 = vadd.xlane.f32.xlu0 %v782
        %v814 = vpop.xlane.xlu0 %813
        %815 = vadd.xlane.f32.xlu0 %v784
        %v816 = vpop.xlane.xlu0 %815
        %817 = vadd.xlane.f32.xlu0 %v786
        %v818 = vpop.xlane.xlu0 %817
        %819 = vadd.xlane.f32.xlu0 %v788
        %v820 = vpop.xlane.xlu0 %819
        %821 = vadd.xlane.f32.xlu0 %v790
        %v822 = vpop.xlane.xlu0 %821
        %823 = vadd.xlane.f32.xlu0 %v792
        %v824 = vpop.xlane.xlu0 %823
        %825 = vadd.xlane.f32.xlu0 %v794
        %v826 = vpop.xlane.xlu0 %825
        %827 = vadd.xlane.f32.xlu0 %v796
        %v828 = vpop.xlane.xlu0 %827
        %829 = vadd.xlane.f32.xlu0 %v798
        %v830 = vpop.xlane.xlu0 %829
        %831 = vadd.xlane.f32.xlu0 %v800
        %v832 = vpop.xlane.xlu0 %831
        %833 = vadd.xlane.f32.xlu0 %v802
        %v834 = vpop.xlane.xlu0 %833
        %835 = vadd.xlane.f32.xlu0 %v804
        %v836 = vpop.xlane.xlu0 %835
        %837 = vadd.xlane.f32.xlu0 %v806
        %v838 = vpop.xlane.xlu0 %837
        %839 = vadd.xlane.f32.xlu0 %v808
        %v840 = vpop.xlane.xlu0 %839
        %841 = vadd.xlane.f32.xlu0 %v810
        %v842 = vpop.xlane.xlu0 %841
        %843 = vadd.xlane.f32.xlu0 %v812
        %v844 = vpop.xlane.xlu0 %843
        %v845 = vrcp.pop %v814
        %v846 = vrcp.pop %v816
        %v847 = vrcp.pop %v818
        %v848 = vrcp.pop %v820
        %v849 = vrcp.pop %v822
        %v850 = vrcp.pop %v824
        %v851 = vrcp.pop %v826
        %v852 = vrcp.pop %v828
        %v853 = vrcp.pop %v830
        %v854 = vrcp.pop %v832
        %v855 = vrcp.pop %v834
        %v856 = vrcp.pop %v836
        %v857 = vrcp.pop %v838
        %v858 = vrcp.pop %v840
        %v859 = vrcp.pop %v842
        %v860 = vrcp.pop %v844
        %v861 = vmul.f32 %v782, %v845
        %v862 = vmul.f32 %v784, %v846
        %v863 = vmul.f32 %v786, %v847
        %v864 = vmul.f32 %v788, %v848
        %v865 = vmul.f32 %v790, %v849
        %v866 = vmul.f32 %v792, %v850
        %v867 = vmul.f32 %v794, %v851
        %v868 = vmul.f32 %v796, %v852
        %v869 = vmul.f32 %v798, %v853
        %v870 = vmul.f32 %v800, %v854
        %v871 = vmul.f32 %v802, %v855
        %v872 = vmul.f32 %v804, %v856
        %v873 = vmul.f32 %v806, %v857
        %v874 = vmul.f32 %v808, %v858
        %v875 = vmul.f32 %v810, %v859
        %v876 = vmul.f32 %v812, %v860
        %v877 = vpack.c.bf16 %v862, %v861
        %v878 = vpack.c.bf16 %v864, %v863
        %v879 = vpack.c.bf16 %v866, %v865
        %v880 = vpack.c.bf16 %v868, %v867
        %v881 = vpack.c.bf16 %v870, %v869
        %v882 = vpack.c.bf16 %v872, %v871
        %v883 = vpack.c.bf16 %v874, %v873
        %v884 = vpack.c.bf16 %v876, %v875
        %v885 = vld [vmem:[%s357] sm:$0xf]
        %v886 = vld [vmem:[%s357 + $0x4] sm:$0xf]
        %v887 = vld [vmem:[%s357 + $0x8] sm:$0xf]
        %v888 = vld [vmem:[%s357 + $0xc] sm:$0xf]
        %v889 = vld [vmem:[%s357 + $0x10] sm:$0xf]
        %v890 = vld [vmem:[%s357 + $0x14] sm:$0xf]
        %v891 = vld [vmem:[%s357 + $0x18] sm:$0xf]
        %v892 = vld [vmem:[%s357 + $0x1c] sm:$0xf]
        %v893 = vld [vmem:[%s357 + $0x20] sm:$0xf]
        %v894 = vld [vmem:[%s357 + $0x24] sm:$0xf]
        %v895 = vld [vmem:[%s357 + $0x28] sm:$0xf]
        %v896 = vld [vmem:[%s357 + $0x2c] sm:$0xf]
        %v897 = vld [vmem:[%s357 + $0x30] sm:$0xf]
        %v898 = vld [vmem:[%s357 + $0x34] sm:$0xf]
        %v899 = vld [vmem:[%s357 + $0x38] sm:$0xf]
        %v900 = vld [vmem:[%s357 + $0x3c] sm:$0xf]
        %v917 = vunpack.c.l.b16 %v885
        %v918 = vunpack.c.l.b16 %v886
        %v919 = vunpack.c.l.b16 %v887
        %v920 = vunpack.c.l.b16 %v888
        %v921 = vunpack.c.l.b16 %v889
        %v922 = vunpack.c.l.b16 %v890
        %v923 = vunpack.c.l.b16 %v891
        %v924 = vunpack.c.l.b16 %v892
        %v925 = vunpack.c.l.b16 %v893
        %v926 = vunpack.c.l.b16 %v894
        %v927 = vunpack.c.l.b16 %v895
        %v928 = vunpack.c.l.b16 %v896
        %v929 = vunpack.c.l.b16 %v897
        %v930 = vunpack.c.l.b16 %v898
        %v931 = vunpack.c.l.b16 %v899
        %v932 = vunpack.c.l.b16 %v900
        %v933 = vpack.c.b16 %v918, %v917
        %v934 = vpack.c.b16 %v920, %v919
        %v935 = vpack.c.b16 %v922, %v921
        %v936 = vpack.c.b16 %v924, %v923
        %v937 = vpack.c.b16 %v926, %v925
        %v938 = vpack.c.b16 %v928, %v927
        %v939 = vpack.c.b16 %v930, %v929
        %v940 = vpack.c.b16 %v932, %v931
        %949 = vmatprep.subr.bf16.mxu0 0
        %950 = vmatpush1.bf16.msra.mxu0 %v933
        %951 = vmatprep.subr.bf16.mxu0 0
        %952 = vmatpush1.bf16.msra.mxu0 %v934
        %953 = vmatprep.subr.bf16.mxu0 0
        %954 = vmatpush1.bf16.msra.mxu0 %v935
        %955 = vmatprep.subr.bf16.mxu0 0
        %956 = vmatpush1.bf16.msra.mxu0 %v936
        %957 = vmatprep.subr.bf16.mxu0 0
        %958 = vmatpush1.bf16.msra.mxu0 %v937
        %959 = vmatprep.subr.bf16.mxu0 0
        %960 = vmatpush1.bf16.msra.mxu0 %v938
        %961 = vmatprep.subr.bf16.mxu0 0
        %962 = vmatpush1.bf16.msra.mxu0 %v939
        %963 = vmatprep.subr.bf16.mxu0 0
        %964 = vmatpush1.bf16.msra.mxu0 %v940
        %965 = vmatprep.subr.bf16.mxu0 0
        %966 = vmatpush1.bf16.msra.mxu0 0
        %967 = vmatprep.subr.bf16.mxu0 0
        %968 = vmatpush1.bf16.msra.mxu0 0
        %969 = vmatprep.subr.bf16.mxu0 0
        %970 = vmatpush1.bf16.msra.mxu0 0
        %971 = vmatprep.subr.bf16.mxu0 0
        %972 = vmatpush1.bf16.msra.mxu0 0
        %973 = vmatprep.subr.bf16.mxu0 0
        %974 = vmatpush1.bf16.msra.mxu0 0
        %975 = vmatprep.subr.bf16.mxu0 0
        %976 = vmatpush1.bf16.msra.mxu0 0
        %977 = vmatprep.subr.bf16.mxu0 0
        %978 = vmatpush1.bf16.msra.mxu0 0
        %979 = vmatprep.subr.bf16.mxu0 0
        %980 = vmatpush1.bf16.msra.mxu0 0
        %981 = vmatprep.mubr.bf16.mxu0 0
        %982 = vmatmul.mubr.bf16.gmra.mrb[0].mxu0 %v877
        %v983 = vpop.f32.mrb[0].mxu0
        %v984 = vadd.f32 0.0, %v983
        %v985 = vpop.f32.mrb[0].mxu0
        %v986 = vpop.f32.mrb[0].mxu0
        %v987 = vadd.f32 0.0, %v986
        %v988 = vpop.f32.mrb[0].mxu0
        %989 = vmatprep.mubr.bf16.mxu0 0
        %990 = vmatmul.mubr.bf16.gmra.mrb[0].mxu0 %v878
        %v991 = vpop.f32.mrb[0].mxu0
        %v992 = vadd.f32 0.0, %v991
        %v993 = vpop.f32.mrb[0].mxu0
        %v994 = vpop.f32.mrb[0].mxu0
        %v995 = vadd.f32 0.0, %v994
        %v996 = vpop.f32.mrb[0].mxu0
        %997 = vmatprep.mubr.bf16.mxu0 0
        %998 = vmatmul.mubr.bf16.gmra.mrb[0].mxu0 %v879
        %v999 = vpop.f32.mrb[0].mxu0
        %v1000 = vadd.f32 0.0, %v999
        %v1001 = vpop.f32.mrb[0].mxu0
        %v1002 = vpop.f32.mrb[0].mxu0
        %v1003 = vadd.f32 0.0, %v1002
        %v1004 = vpop.f32.mrb[0].mxu0
        %1005 = vmatprep.mubr.bf16.mxu0 0
        %1006 = vmatmul.mubr.bf16.gmra.mrb[0].mxu0 %v880
        %v1007 = vpop.f32.mrb[0].mxu0
        %v1008 = vadd.f32 0.0, %v1007
        %v1009 = vpop.f32.mrb[0].mxu0
        %v1010 = vpop.f32.mrb[0].mxu0
        %v1011 = vadd.f32 0.0, %v1010
        %v1012 = vpop.f32.mrb[0].mxu0
        %1013 = vmatprep.mubr.bf16.mxu0 0
        %1014 = vmatmul.mubr.bf16.gmra.mrb[0].mxu0 %v881
        %v1015 = vpop.f32.mrb[0].mxu0
        %v1016 = vadd.f32 0.0, %v1015
        %v1017 = vpop.f32.mrb[0].mxu0
        %v1018 = vpop.f32.mrb[0].mxu0
        %v1019 = vadd.f32 0.0, %v1018
        %v1020 = vpop.f32.mrb[0].mxu0
        %1021 = vmatprep.mubr.bf16.mxu0 0
        %1022 = vmatmul.mubr.bf16.gmra.mrb[0].mxu0 %v882
        %v1023 = vpop.f32.mrb[0].mxu0
        %v1024 = vadd.f32 0.0, %v1023
        %v1025 = vpop.f32.mrb[0].mxu0
        %v1026 = vpop.f32.mrb[0].mxu0
        %v1027 = vadd.f32 0.0, %v1026
        %v1028 = vpop.f32.mrb[0].mxu0
        %1029 = vmatprep.mubr.bf16.mxu0 0
        %1030 = vmatmul.mubr.bf16.gmra.mrb[0].mxu0 %v883
        %v1031 = vpop.f32.mrb[0].mxu0
        %v1032 = vadd.f32 0.0, %v1031
        %v1033 = vpop.f32.mrb[0].mxu0
        %v1034 = vpop.f32.mrb[0].mxu0
        %v1035 = vadd.f32 0.0, %v1034
        %v1036 = vpop.f32.mrb[0].mxu0
        %1037 = vmatprep.mubr.bf16.mxu0 0
        %1038 = vmatmul.mubr.bf16.gmra.mrb[0].mxu0 %v884
        %v1039 = vpop.f32.mrb[0].mxu0
        %v1040 = vadd.f32 0.0, %v1039
        %v1041 = vpop.f32.mrb[0].mxu0
        %v1042 = vpop.f32.mrb[0].mxu0
        %v1043 = vadd.f32 0.0, %v1042
        %v1044 = vpop.f32.mrb[0].mxu0
        %1045 = vdwg.mxu0
        %v1046 = vld [vmem:[#allocation2] sm:$0xff]
        %v1047 = vld [vmem:[#allocation2 + $0x8] sm:$0xff]
        %v1048 = vld [vmem:[#allocation2 + $0x10] sm:$0xff]
        %v1049 = vld [vmem:[#allocation2 + $0x18] sm:$0xff]
        %v1050 = vld [vmem:[#allocation2 + $0x20] sm:$0xff]
        %v1051 = vld [vmem:[#allocation2 + $0x28] sm:$0xff]
        %v1052 = vld [vmem:[#allocation2 + $0x30] sm:$0xff]
        %v1053 = vld [vmem:[#allocation2 + $0x38] sm:$0xff]
        %v1054 = vld [vmem:[#allocation2 + $0x40] sm:$0xff]
        %v1055 = vld [vmem:[#allocation2 + $0x48] sm:$0xff]
        %v1056 = vld [vmem:[#allocation2 + $0x50] sm:$0xff]
        %v1057 = vld [vmem:[#allocation2 + $0x58] sm:$0xff]
        %v1058 = vld [vmem:[#allocation2 + $0x60] sm:$0xff]
        %v1059 = vld [vmem:[#allocation2 + $0x68] sm:$0xff]
        %v1060 = vld [vmem:[#allocation2 + $0x70] sm:$0xff]
        %v1061 = vld [vmem:[#allocation2 + $0x78] sm:$0xff]
        %v1062 = vpack.c.bf16 %v987, %v984
        %v1063 = vpack.c.bf16 %v995, %v992
        %v1064 = vpack.c.bf16 %v1003, %v1000
        %v1065 = vpack.c.bf16 %v1011, %v1008
        %v1066 = vpack.c.bf16 %v1019, %v1016
        %v1067 = vpack.c.bf16 %v1027, %v1024
        %v1068 = vpack.c.bf16 %v1035, %v1032
        %v1069 = vpack.c.bf16 %v1043, %v1040
        %v1070 = vld [vmem:[%s361] sm:$0xf]
        %v1072 = vsel %vm588, %v1062, 0
        %v1075 = vsel %vm588, %v1063, 0
        %v1078 = vsel %vm588, %v1064, 0
        %v1081 = vsel %vm588, %v1065, 0
        %v1084 = vsel %vm588, %v1066, 0
        %v1087 = vsel %vm588, %v1067, 0
        %v1090 = vsel %vm588, %v1068, 0
        %v1093 = vsel %vm588, %v1069, 0
        %v1096 = vsel %vm613, %v1070, 0
        %1098 = vmatprep.subr.bf16.mxu0 0
        %1099 = vmatpush1.bf16.msra.mxu0 %v1096
        %1100 = vmatprep.subr.bf16.mxu0 0
        %1101 = vmatpush1.bf16.msra.mxu0 0
        %1102 = vmatprep.subr.bf16.mxu0 0
        %1103 = vmatpush1.bf16.msra.mxu0 0
        %1104 = vmatprep.subr.bf16.mxu0 0
        %1105 = vmatpush1.bf16.msra.mxu0 0
        %1106 = vmatprep.subr.bf16.mxu0 0
        %1107 = vmatpush1.bf16.msra.mxu0 0
        %1108 = vmatprep.subr.bf16.mxu0 0
        %1109 = vmatpush1.bf16.msra.mxu0 0
        %1110 = vmatprep.subr.bf16.mxu0 0
        %1111 = vmatpush1.bf16.msra.mxu0 0
        %1112 = vmatprep.subr.bf16.mxu0 0
        %1113 = vmatpush1.bf16.msra.mxu0 0
        %1114 = vmatprep.subr.bf16.mxu0 0
        %1115 = vmatpush1.bf16.msra.mxu0 0
        %1116 = vmatprep.subr.bf16.mxu0 0
        %1117 = vmatpush1.bf16.msra.mxu0 0
        %1118 = vmatprep.subr.bf16.mxu0 0
        %1119 = vmatpush1.bf16.msra.mxu0 0
        %1120 = vmatprep.subr.bf16.mxu0 0
        %1121 = vmatpush1.bf16.msra.mxu0 0
        %1122 = vmatprep.subr.bf16.mxu0 0
        %1123 = vmatpush1.bf16.msra.mxu0 0
        %1124 = vmatprep.subr.bf16.mxu0 0
        %1125 = vmatpush1.bf16.msra.mxu0 0
        %1126 = vmatprep.subr.bf16.mxu0 0
        %1127 = vmatpush1.bf16.msra.mxu0 0
        %1128 = vmatprep.subr.bf16.mxu0 0
        %1129 = vmatpush1.bf16.msra.mxu0 0
        %1130 = vmatprep.mubr.bf16.mxu0 0
        %1131 = vmatmul.mubr.bf16.gmra.mrb[0].mxu0 %v1072
        %v1132 = vpop.f32.mrb[0].mxu0
        %v1133 = vadd.f32 0.0, %v1132
        %v1134 = vpop.f32.mrb[0].mxu0
        %v1135 = vpop.f32.mrb[0].mxu0
        %v1136 = vadd.f32 0.0, %v1135
        %v1137 = vpop.f32.mrb[0].mxu0
        %1138 = vmatprep.mubr.bf16.mxu0 0
        %1139 = vmatmul.mubr.bf16.gmra.mrb[0].mxu0 %v1075
        %v1140 = vpop.f32.mrb[0].mxu0
        %v1141 = vadd.f32 0.0, %v1140
        %v1142 = vpop.f32.mrb[0].mxu0
        %v1143 = vpop.f32.mrb[0].mxu0
        %v1144 = vadd.f32 0.0, %v1143
        %v1145 = vpop.f32.mrb[0].mxu0
        %1146 = vmatprep.mubr.bf16.mxu0 0
        %1147 = vmatmul.mubr.bf16.gmra.mrb[0].mxu0 %v1078
        %v1148 = vpop.f32.mrb[0].mxu0
        %v1149 = vadd.f32 0.0, %v1148
        %v1150 = vpop.f32.mrb[0].mxu0
        %v1151 = vpop.f32.mrb[0].mxu0
        %v1152 = vadd.f32 0.0, %v1151
        %v1153 = vpop.f32.mrb[0].mxu0
        %1154 = vmatprep.mubr.bf16.mxu0 0
        %1155 = vmatmul.mubr.bf16.gmra.mrb[0].mxu0 %v1081
        %v1156 = vpop.f32.mrb[0].mxu0
        %v1157 = vadd.f32 0.0, %v1156
        %v1158 = vpop.f32.mrb[0].mxu0
        %v1159 = vpop.f32.mrb[0].mxu0
        %v1160 = vadd.f32 0.0, %v1159
        %v1161 = vpop.f32.mrb[0].mxu0
        %1162 = vmatprep.mubr.bf16.mxu0 0
        %1163 = vmatmul.mubr.bf16.gmra.mrb[0].mxu0 %v1084
        %v1164 = vpop.f32.mrb[0].mxu0
        %v1165 = vadd.f32 0.0, %v1164
        %v1166 = vpop.f32.mrb[0].mxu0
        %v1167 = vpop.f32.mrb[0].mxu0
        %v1168 = vadd.f32 0.0, %v1167
        %v1169 = vpop.f32.mrb[0].mxu0
        %1170 = vmatprep.mubr.bf16.mxu0 0
        %1171 = vmatmul.mubr.bf16.gmra.mrb[0].mxu0 %v1087
        %v1172 = vpop.f32.mrb[0].mxu0
        %v1173 = vadd.f32 0.0, %v1172
        %v1174 = vpop.f32.mrb[0].mxu0
        %v1175 = vpop.f32.mrb[0].mxu0
        %v1176 = vadd.f32 0.0, %v1175
        %v1177 = vpop.f32.mrb[0].mxu0
        %1178 = vmatprep.mubr.bf16.mxu0 0
        %1179 = vmatmul.mubr.bf16.gmra.mrb[0].mxu0 %v1090
        %v1180 = vpop.f32.mrb[0].mxu0
        %v1181 = vadd.f32 0.0, %v1180
        %v1182 = vpop.f32.mrb[0].mxu0
        %v1183 = vpop.f32.mrb[0].mxu0
        %v1184 = vadd.f32 0.0, %v1183
        %v1185 = vpop.f32.mrb[0].mxu0
        %1186 = vmatprep.mubr.bf16.mxu0 0
        %1187 = vmatmul.mubr.bf16.gmra.mrb[0].mxu0 %v1093
        %v1188 = vpop.f32.mrb[0].mxu0
        %v1189 = vadd.f32 0.0, %v1188
        %v1190 = vpop.f32.mrb[0].mxu0
        %v1191 = vpop.f32.mrb[0].mxu0
        %v1192 = vadd.f32 0.0, %v1191
        %v1193 = vpop.f32.mrb[0].mxu0
        %1194 = vdwg.mxu0
        %v1195 = vadd.f32 %v1046, %v1133
        %v1196 = vadd.f32 %v1047, %v1136
        %v1197 = vadd.f32 %v1048, %v1141
        %v1198 = vadd.f32 %v1049, %v1144
        %v1199 = vadd.f32 %v1050, %v1149
        %v1200 = vadd.f32 %v1051, %v1152
        %v1201 = vadd.f32 %v1052, %v1157
        %v1202 = vadd.f32 %v1053, %v1160
        %v1203 = vadd.f32 %v1054, %v1165
        %v1204 = vadd.f32 %v1055, %v1168
        %v1205 = vadd.f32 %v1056, %v1173
        %v1206 = vadd.f32 %v1057, %v1176
        %v1207 = vadd.f32 %v1058, %v1181
        %v1208 = vadd.f32 %v1059, %v1184
        %v1209 = vadd.f32 %v1060, %v1189
        %v1210 = vadd.f32 %v1061, %v1192
        %1211 = vst.msk [vmem:[#allocation2] sm:$0xff] %vm457, %v1195
        %1212 = vst.msk [vmem:[#allocation2 + $0x8] sm:$0xff] %vm457, %v1196
        %1213 = vst.msk [vmem:[#allocation2 + $0x10] sm:$0xff] %vm457, %v1197
        %1214 = vst.msk [vmem:[#allocation2 + $0x18] sm:$0xff] %vm457, %v1198
        %1215 = vst.msk [vmem:[#allocation2 + $0x20] sm:$0xff] %vm457, %v1199
        %1216 = vst.msk [vmem:[#allocation2 + $0x28] sm:$0xff] %vm457, %v1200
        %1217 = vst.msk [vmem:[#allocation2 + $0x30] sm:$0xff] %vm457, %v1201
        %1218 = vst.msk [vmem:[#allocation2 + $0x38] sm:$0xff] %vm457, %v1202
        %1219 = vst.msk [vmem:[#allocation2 + $0x40] sm:$0xff] %vm457, %v1203
        %1220 = vst.msk [vmem:[#allocation2 + $0x48] sm:$0xff] %vm457, %v1204
        %1221 = vst.msk [vmem:[#allocation2 + $0x50] sm:$0xff] %vm457, %v1205
        %1222 = vst.msk [vmem:[#allocation2 + $0x58] sm:$0xff] %vm457, %v1206
        %1223 = vst.msk [vmem:[#allocation2 + $0x60] sm:$0xff] %vm457, %v1207
        %1224 = vst.msk [vmem:[#allocation2 + $0x68] sm:$0xff] %vm457, %v1208
        %1225 = vst.msk [vmem:[#allocation2 + $0x70] sm:$0xff] %vm457, %v1209
        %1226 = vst.msk [vmem:[#allocation2 + $0x78] sm:$0xff] %vm457, %v1210
        %p1227 = scmp.eq.s32.totalorder %s26, 3
        // Predicated region
        $region45: #{efficient_self_attention.3} parent=39 // pred_check
          %p1228 = pneg %p1227
        $region46: #{efficient_self_attention.3} parent=39 // pred_check_branch
          %1230 = sbr.rel (%p1228) target = $region48
        $region47: #{efficient_self_attention.3} parent=39 // pred_region
          %v1231 = vld [vmem:[#allocation2] sm:$0xff]
          %v1232 = vld [vmem:[#allocation2 + $0x8] sm:$0xff]
          %v1233 = vld [vmem:[#allocation2 + $0x10] sm:$0xff]
          %v1234 = vld [vmem:[#allocation2 + $0x18] sm:$0xff]
          %v1235 = vld [vmem:[#allocation2 + $0x20] sm:$0xff]
          %v1236 = vld [vmem:[#allocation2 + $0x28] sm:$0xff]
          %v1237 = vld [vmem:[#allocation2 + $0x30] sm:$0xff]
          %v1238 = vld [vmem:[#allocation2 + $0x38] sm:$0xff]
          %v1239 = vld [vmem:[#allocation2 + $0x40] sm:$0xff]
          %v1240 = vld [vmem:[#allocation2 + $0x48] sm:$0xff]
          %v1241 = vld [vmem:[#allocation2 + $0x50] sm:$0xff]
          %v1242 = vld [vmem:[#allocation2 + $0x58] sm:$0xff]
          %v1243 = vld [vmem:[#allocation2 + $0x60] sm:$0xff]
          %v1244 = vld [vmem:[#allocation2 + $0x68] sm:$0xff]
          %v1245 = vld [vmem:[#allocation2 + $0x70] sm:$0xff]
          %v1246 = vld [vmem:[#allocation2 + $0x78] sm:$0xff]
          %1247 = vst.msk [vmem:[%s325] sm:$0xff] %vm457, %v1231
          %1248 = vst.msk [vmem:[%s325 + $0x8] sm:$0xff] %vm457, %v1232
          %1249 = vst.msk [vmem:[%s325 + $0x10] sm:$0xff] %vm457, %v1233
          %1250 = vst.msk [vmem:[%s325 + $0x18] sm:$0xff] %vm457, %v1234
          %1251 = vst.msk [vmem:[%s325 + $0x20] sm:$0xff] %vm457, %v1235
          %1252 = vst.msk [vmem:[%s325 + $0x28] sm:$0xff] %vm457, %v1236
          %1253 = vst.msk [vmem:[%s325 + $0x30] sm:$0xff] %vm457, %v1237
          %1254 = vst.msk [vmem:[%s325 + $0x38] sm:$0xff] %vm457, %v1238
          %1255 = vst.msk [vmem:[%s325 + $0x40] sm:$0xff] %vm457, %v1239
          %1256 = vst.msk [vmem:[%s325 + $0x48] sm:$0xff] %vm457, %v1240
          %1257 = vst.msk [vmem:[%s325 + $0x50] sm:$0xff] %vm457, %v1241
          %1258 = vst.msk [vmem:[%s325 + $0x58] sm:$0xff] %vm457, %v1242
          %1259 = vst.msk [vmem:[%s325 + $0x60] sm:$0xff] %vm457, %v1243
          %1260 = vst.msk [vmem:[%s325 + $0x68] sm:$0xff] %vm457, %v1244
          %1261 = vst.msk [vmem:[%s325 + $0x70] sm:$0xff] %vm457, %v1245
          %1262 = vst.msk [vmem:[%s325 + $0x78] sm:$0xff] %vm457, %v1246
        $region48: #{efficient_self_attention.3} parent=39 // pred_fallthru
          _
        %s1263 = sand.u32 %s184, 1
        %s1264 = scalar_lea.sflag [#allocation4], %s1263
        %s1265 = sand.u32 %s184, 1
        %s1266 = smul.addr %s1265, 128
        %s1267 = scalar_lea.vmem [#allocation3], %s1266
        // Predicated region
        $region49: #{efficient_self_attention.3} parent=39 // pred_check
          %p1268 = pneg %p194
        $region50: #{efficient_self_attention.3} parent=39 // pred_check_branch
          %1270 = sbr.rel (%p1268) target = $region52
        $region51: #{efficient_self_attention.3} parent=39 // pred_region
          %s1271 = smul.u32 16, %s25
          %s1273 = ssub.s32 2048, 2048
          %1274 = vsyncadd %s1264, %s1273
          %s1275 = smul.addr %s24, 32
          %s1276 = sadd.s32 %s1271, %s1275
          %s1277 = smul.addr %s1276, 128
          %s1278 = scalar_lea.hbm %s5, %s1277
          %s1279 = sshll.u32 %s1267, 4
          %s1280 = int_to_ptr.vmem [resolvable:$true] %s1279
          %1285 = dma.vmem_to_hbm [thread:$0]  %s1280, 2048, %s1278, %s1264, 128, 128, 8
        $region52: #{efficient_self_attention.3} parent=39 // pred_fallthru
          _
      $region40: #{efficient_self_attention.3} parent=5 // pred_fallthru
        _
      %p1286 = scmp.le.s32.totalorder 2, %s14
      // Predicated region
      $region53: #{efficient_self_attention.3} parent=5 // pred_check
        %p1287 = pneg %p1286
      $region54: #{efficient_self_attention.3} parent=5 // pred_check_branch
        %1289 = sbr.rel (%p1287) target = $region56
      $region55: #{efficient_self_attention.3} parent=5 // pred_region
        %s1290 = ssub.s32 %s14, 2
        // Predicated region
        $region57: #{efficient_self_attention.3} parent=55 // pred_check
          %p1291 = pneg %p200
        $region58: #{efficient_self_attention.3} parent=55 // pred_check_branch
          %1293 = sbr.rel (%p1291) target = $region60
        $region59: #{efficient_self_attention.3} parent=55 // pred_region
          %s1294 = sand.u32 %s185, 1
          %s1295 = scalar_lea.sflag [#allocation4], %s1294
          %s1296 = sand.u32 %s185, 1
          %s1297 = smul.addr %s1296, 128
          %s1298 = scalar_lea.vmem [#allocation3], %s1297
          %1299 = dma.done %s1295, 2048
        $region60: #{efficient_self_attention.3} parent=55 // pred_fallthru
          _
      $region56: #{efficient_self_attention.3} parent=5 // pred_fallthru
        _
    $region6: #{efficient_self_attention.3} parent=1 // loop_footer
      %s18 = sadd.s32 1, %s14
    $region7: #{efficient_self_attention.3} parent=1 // loop_footer_branch
      %13 = sbr.rel target = $region3
    $region8: #{efficient_self_attention.3} parent=1 // loop_exit
      _
    %1300 = vsyncpa [#allocation4], 1
    %s1301 = scalar_lea.sflag [#allocation4], 1
    %1302 = vsyncpa %s1301, 1

</llo_original>
